<compile_context>
chip_gen: v6e
topology: v6e:2x2x1
jax: 0.10.0
libtpu: 0.0.40
codegen_flags: <defaults>
</compile_context>

<pallas_src>
import math
import numpy as np
import jax
import jax.numpy as jnp
from jax import lax
from jax.experimental import pallas as pl
from jax.experimental.pallas import tpu as pltpu

# ----------------------------- configuration -------------------------------
B, T = 2, 8
N_EMBD = 32          # C
DIM_ATT = 32         # A
DIM_FFN = 64         # F
N_LAYER = 4
LAYER_ID = 1         # > 0  ->  standard path (no ln0 / pre_ffn / tiny att)
LN_EPS = 1e-5        # torch.nn.LayerNorm default


# ------------------------------- kernel ------------------------------------
def _block_kernel(x_ref,
                  ln1_g_ref, ln1_b_ref, ln2_g_ref, ln2_b_ref,
                  a_tmk_ref, a_tmv_ref, a_tmr_ref, a_decay_ref, a_first_ref,
                  a_wkvr_ref, a_wo_ref,
                  f_tmk_ref, f_tmr_ref, f_wkr_ref, f_wv_ref,
                  o_ref):
    x = x_ref[0]                       # (T, C) for this batch element
    Tn, Cn = x.shape
    An = a_decay_ref.shape[1]
    Fn = f_wv_ref.shape[0]

    def layernorm(z, g_ref, b_ref):
        mu = jnp.mean(z, axis=-1, keepdims=True)
        var = jnp.mean((z - mu) ** 2, axis=-1, keepdims=True)
        return (z - mu) * lax.rsqrt(var + LN_EPS) * g_ref[...] + b_ref[...]

    def time_shift(z):                 # xx[t] = z[t-1], xx[0] = 0
        rolled = pltpu.roll(z, shift=1, axis=0)                 # XLU sublane rotate
        row = lax.broadcasted_iota(jnp.int32, z.shape, 0)
        return jnp.where(row == 0, 0.0, rolled)                 # zero wrapped row 0

    # ------------------------- RWKV TimeMix (att) ---------------------------
    xn = layernorm(x, ln1_g_ref, ln1_b_ref)
    xx = time_shift(xn)
    tmk, tmv, tmr = a_tmk_ref[...], a_tmv_ref[...], a_tmr_ref[...]
    xk = xn * tmk + xx * (1.0 - tmk)
    xv = xn * tmv + xx * (1.0 - tmv)
    xr = xn * tmr + xx * (1.0 - tmr)

    # One MXU pass: [xk | xv | xr] (T,3C) @ blockdiag(Wk,Wv,Wr) (3C,3A) -> [k|v|r]
    mix3 = jnp.concatenate([xk, xv, xr], axis=-1)               # (T, 3C)
    kvr = jnp.dot(mix3, a_wkvr_ref[...],
                  preferred_element_type=jnp.float32)           # (T, 3A)
    k = kvr[:, :An]
    v = kvr[:, An:2 * An]
    sr = jax.nn.sigmoid(kvr[:, 2 * An:3 * An])

    # WKV recurrence (numerically stable RWKV-4 form), state carried in vregs,
    # statically unrolled over the (small, static) time dimension.
    w = -jnp.exp(a_decay_ref[...])     # (1, A)
    u = a_first_ref[...]               # (1, A)
    aa = jnp.zeros((1, An), jnp.float32)
    bb = jnp.zeros((1, An), jnp.float32)
    pp = jnp.full((1, An), -1e38, jnp.float32)
    ys = []
    for t in range(Tn):                # static unroll: LLO can pipeline the exps
        kt = k[t:t + 1, :]             # (1, A)
        vt = v[t:t + 1, :]
        ww = u + kt
        qq = jnp.maximum(pp, ww)
        e1 = jnp.exp(pp - qq)
        e2 = jnp.exp(ww - qq)
        ys.append((e1 * aa + e2 * vt) / (e1 * bb + e2))
        ww2 = w + pp
        qq2 = jnp.maximum(ww2, kt)
        e1 = jnp.exp(ww2 - qq2)
        e2 = jnp.exp(kt - qq2)
        aa = e1 * aa + e2 * vt
        bb = e1 * bb + e2
        pp = qq2
    y = jnp.concatenate(ys, axis=0)    # (T, A)

    rwkv = sr * y
    att_out = jnp.dot(rwkv, a_wo_ref[...], preferred_element_type=jnp.float32)
    x1 = x + att_out                   # first residual

    # ----------------------- RWKV ChannelMix (ffn) --------------------------
    xn2 = layernorm(x1, ln2_g_ref, ln2_b_ref)
    xx2 = time_shift(xn2)
    ftmk, ftmr = f_tmk_ref[...], f_tmr_ref[...]
    xk2 = xn2 * ftmk + xx2 * (1.0 - ftmk)
    xr2 = xn2 * ftmr + xx2 * (1.0 - ftmr)

    # One MXU pass: [xk2 | xr2] (T,2C) @ blockdiag(Wk,Wr) (2C,F+C) -> [k | r]
    mix2 = jnp.concatenate([xk2, xr2], axis=-1)                 # (T, 2C)
    kr = jnp.dot(mix2, f_wkr_ref[...],
                 preferred_element_type=jnp.float32)            # (T, F+C)
    kf = jnp.square(jnp.maximum(kr[:, :Fn], 0.0))               # relu^2
    rf = jax.nn.sigmoid(kr[:, Fn:])
    kv = jnp.dot(kf, f_wv_ref[...], preferred_element_type=jnp.float32)

    o_ref[0] = x1 + rf * kv            # second residual


# ------------------------------ wrapper -------------------------------------
def rwkv_block(x, params):
    (ln1_g, ln1_b, ln2_g, ln2_b,
     a_tmk, a_tmv, a_tmr, a_decay, a_first,
     a_wk, a_wv, a_wr, a_wo,
     f_tmk, f_tmr, f_wk, f_wv, f_wr) = params

    Bn, Tn, Cn = x.shape
    An = a_wk.shape[1]
    Fn = f_wk.shape[1]

    # Fused block-diagonal projection weights (different mixed inputs per
    # projection -> block-diag keeps the math exact while using a single
    # wide MXU matmul per group).
    zCA = jnp.zeros((Cn, An), jnp.float32)
    a_wkvr = jnp.concatenate([
        jnp.concatenate([a_wk, zCA, zCA], axis=1),
        jnp.concatenate([zCA, a_wv, zCA], axis=1),
        jnp.concatenate([zCA, zCA, a_wr], axis=1)], axis=0)      # (3C, 3A)

    f_wkr = jnp.concatenate([
        jnp.concatenate([f_wk, jnp.zeros((Cn, Cn), jnp.float32)], axis=1),
        jnp.concatenate([jnp.zeros((Cn, Fn), jnp.float32), f_wr], axis=1)],
        axis=0)                                                  # (2C, F+C)

    def full(shape):
        return pl.BlockSpec(shape, lambda b, _s=shape: (0,) * len(_s))

    in_specs = [
        pl.BlockSpec((1, Tn, Cn), lambda b: (b, 0, 0)),          # x: one batch / step
        full((1, Cn)), full((1, Cn)), full((1, Cn)), full((1, Cn)),   # ln1 / ln2
        full((1, Cn)), full((1, Cn)), full((1, Cn)),                  # att time_mix
        full((1, An)), full((1, An)),                                 # decay, first
        full((3 * Cn, 3 * An)), full((An, Cn)),                       # att fused W, Wo
        full((1, Cn)), full((1, Cn)),                                 # ffn time_mix
        full((2 * Cn, Fn + Cn)), full((Fn, Cn)),                      # ffn fused W, Wv
    ]
    out_specs = pl.BlockSpec((1, Tn, Cn), lambda b: (b, 0, 0))

    return pl.pallas_call(
        _block_kernel,
        out_shape=jax.ShapeDtypeStruct((Bn, Tn, Cn), jnp.float32),
        grid=(Bn,),
        in_specs=in_specs,
        out_specs=out_specs,
        compiler_params=pltpu.CompilerParams(dimension_semantics=("parallel",)),
    )(x, ln1_g, ln1_b, ln2_g, ln2_b,
      a_tmk, a_tmv, a_tmr, a_decay, a_first,
      a_wkvr, a_wo,
      f_tmk, f_tmr, f_wkr, f_wv)


# -------------------------- parameter construction --------------------------
def init_params(key):
    C, A, F = N_EMBD, DIM_ATT, DIM_FFN
    ratio_0_to_1 = LAYER_ID / (N_LAYER - 1)
    ratio_1_to_almost0 = 1.0 - LAYER_ID / N_LAYER
    ddd = jnp.arange(C, dtype=jnp.float32) / C

    a_tmk = jnp.power(ddd, ratio_1_to_almost0)[None, :]
    a_tmv = (jnp.power(ddd, ratio_1_to_almost0) + 0.3 * ratio_0_to_1)[None, :]
    a_tmr = jnp.power(ddd, 0.5 * ratio_1_to_almost0)[None, :]
    h = jnp.arange(A, dtype=jnp.float32)
    a_decay = (-5.0 + 8.0 * (h / (A - 1)) ** (0.7 + 1.3 * ratio_0_to_1))[None, :]
    zigzag = ((jnp.arange(A, dtype=jnp.float32) + 1.0) % 3.0 - 1.0) * 0.5
    a_first = (jnp.full((A,), math.log(0.3), jnp.float32) + zigzag)[None, :]

    f_tmk = jnp.power(ddd, ratio_1_to_almost0)[None, :]
    f_tmr = jnp.power(ddd, ratio_1_to_almost0)[None, :]

    ln1_g = jnp.ones((1, C), jnp.float32)
    ln1_b = jnp.zeros((1, C), jnp.float32)
    ln2_g = jnp.ones((1, C), jnp.float32)
    ln2_b = jnp.zeros((1, C), jnp.float32)

    keys = jax.random.split(key, 7)

    def lin(k, fan_in, fan_out):      # kaiming-uniform-like, stored as (in, out)
        bound = 1.0 / math.sqrt(fan_in)
        return jax.random.uniform(k, (fan_in, fan_out), jnp.float32, -bound, bound)

    a_wk = lin(keys[0], C, A)
    a_wv = lin(keys[1], C, A)
    a_wr = lin(keys[2], C, A)
    a_wo = lin(keys[3], A, C)
    f_wk = lin(keys[4], C, F)
    f_wv = lin(keys[5], F, C)
    f_wr = lin(keys[6], C, C)

    return (ln1_g, ln1_b, ln2_g, ln2_b,
            a_tmk, a_tmv, a_tmr, a_decay, a_first,
            a_wk, a_wv, a_wr, a_wo,
            f_tmk, f_tmr, f_wk, f_wv, f_wr)


# --------------------------- pure-JAX reference ------------------------------
def ref_block(x, params):
    (ln1_g, ln1_b, ln2_g, ln2_b,
     a_tmk, a_tmv, a_tmr, a_decay, a_first,
     a_wk, a_wv, a_wr, a_wo,
     f_tmk, f_tmr, f_wk, f_wv, f_wr) = params

    def layernorm(z, g, b):
        mu = z.mean(-1, keepdims=True)
        var = ((z - mu) ** 2).mean(-1, keepdims=True)
        return (z - mu) / jnp.sqrt(var + LN_EPS) * g + b

    def time_shift(z):
        return jnp.concatenate([jnp.zeros_like(z[:, :1]), z[:, :-1]], axis=1)

    def wkv(decay, u_, k, v):
        w = -jnp.exp(decay[0])
        u = u_[0]

        def step(carry, kv_t):
            aa, bb, pp = carry
            kt, vt = kv_t
            ww = u + kt
            qq = jnp.maximum(pp, ww)
            e1, e2 = jnp.exp(pp - qq), jnp.exp(ww - qq)
            y = (e1 * aa + e2 * vt) / (e1 * bb + e2)
            ww2 = w + pp
            qq2 = jnp.maximum(ww2, kt)
            e1, e2 = jnp.exp(ww2 - qq2), jnp.exp(kt - qq2)
            return (e1 * aa + e2 * vt, e1 * bb + e2, qq2), y

        Bn, _, An = k.shape
        init = (jnp.zeros((Bn, An)), jnp.zeros((Bn, An)), jnp.full((Bn, An), -1e38))
        _, ys = lax.scan(step, init, (k.transpose(1, 0, 2), v.transpose(1, 0, 2)))
        return ys.transpose(1, 0, 2)

    xn = layernorm(x, ln1_g, ln1_b)
    xx = time_shift(xn)
    xk = xn * a_tmk + xx * (1 - a_tmk)
    xv = xn * a_tmv + xx * (1 - a_tmv)
    xr = xn * a_tmr + xx * (1 - a_tmr)
    k, v, r = xk @ a_wk, xv @ a_wv, xr @ a_wr
    rwkv = jax.nn.sigmoid(r) * wkv(a_decay, a_first, k, v)
    x = x + rwkv @ a_wo

    xn = layernorm(x, ln2_g, ln2_b)
    xx = time_shift(xn)
    xk = xn * f_tmk + xx * (1 - f_tmk)
    xr = xn * f_tmr + xx * (1 - f_tmr)
    kf = jnp.square(jnp.maximum(xk @ f_wk, 0.0))
    return x + jax.nn.sigmoid(xr @ f_wr) * (kf @ f_wv)


# ----------------------------------- main ------------------------------------
if __name__ == "__main__":
    key = jax.random.PRNGKey(0)
    kx, kp = jax.random.split(key)
    x = jax.random.normal(kx, (B, T, N_EMBD), jnp.float32)
    params = init_params(kp)

    out = rwkv_block(x, params)
    out = jax.block_until_ready(out)

    ref = ref_block(x, params)
    np.testing.assert_allclose(np.asarray(out), np.asarray(ref), rtol=2e-3, atol=2e-3)

    print("KERNEL_OK")
</pallas_src>

<mosaic_0001>
module attributes {stable_mosaic.version = 11 : i64} {
  func.func @_block_kernel(%arg0: i32, %arg1: memref<1x8x32xf32, #tpu.memory_space<vmem>>, %arg2: memref<1x32xf32, #tpu.memory_space<vmem>>, %arg3: memref<1x32xf32, #tpu.memory_space<vmem>>, %arg4: memref<1x32xf32, #tpu.memory_space<vmem>>, %arg5: memref<1x32xf32, #tpu.memory_space<vmem>>, %arg6: memref<1x32xf32, #tpu.memory_space<vmem>>, %arg7: memref<1x32xf32, #tpu.memory_space<vmem>>, %arg8: memref<1x32xf32, #tpu.memory_space<vmem>>, %arg9: memref<1x32xf32, #tpu.memory_space<vmem>>, %arg10: memref<1x32xf32, #tpu.memory_space<vmem>>, %arg11: memref<96x96xf32, #tpu.memory_space<vmem>>, %arg12: memref<32x32xf32, #tpu.memory_space<vmem>>, %arg13: memref<1x32xf32, #tpu.memory_space<vmem>>, %arg14: memref<1x32xf32, #tpu.memory_space<vmem>>, %arg15: memref<64x96xf32, #tpu.memory_space<vmem>>, %arg16: memref<64x32xf32, #tpu.memory_space<vmem>>, %arg17: memref<1x8x32xf32, #tpu.memory_space<vmem>>) attributes {dimension_semantics = [#tpu.dimension_semantics<parallel>], iteration_bounds = array<i64: 2>, scalar_prefetch = 0 : i64, scratch_operands = 0 : i64, tpu.core_type = #tpu.core_type<tc>, window_params = [{transform_indices = @transform_0, window_bounds = array<i64: 1, 8, 32>}, {pipeline_mode = #tpu.pipeline_mode<synchronous>, transform_indices = @transform_1, window_bounds = array<i64: 1, 32>}, {pipeline_mode = #tpu.pipeline_mode<synchronous>, transform_indices = @transform_2, window_bounds = array<i64: 1, 32>}, {pipeline_mode = #tpu.pipeline_mode<synchronous>, transform_indices = @transform_3, window_bounds = array<i64: 1, 32>}, {pipeline_mode = #tpu.pipeline_mode<synchronous>, transform_indices = @transform_4, window_bounds = array<i64: 1, 32>}, {pipeline_mode = #tpu.pipeline_mode<synchronous>, transform_indices = @transform_5, window_bounds = array<i64: 1, 32>}, {pipeline_mode = #tpu.pipeline_mode<synchronous>, transform_indices = @transform_6, window_bounds = array<i64: 1, 32>}, {pipeline_mode = #tpu.pipeline_mode<synchronous>, transform_indices = @transform_7, window_bounds = array<i64: 1, 32>}, {pipeline_mode = #tpu.pipeline_mode<synchronous>, transform_indices = @transform_8, window_bounds = array<i64: 1, 32>}, {pipeline_mode = #tpu.pipeline_mode<synchronous>, transform_indices = @transform_9, window_bounds = array<i64: 1, 32>}, {pipeline_mode = #tpu.pipeline_mode<synchronous>, transform_indices = @transform_10, window_bounds = array<i64: 96, 96>}, {pipeline_mode = #tpu.pipeline_mode<synchronous>, transform_indices = @transform_11, window_bounds = array<i64: 32, 32>}, {pipeline_mode = #tpu.pipeline_mode<synchronous>, transform_indices = @transform_12, window_bounds = array<i64: 1, 32>}, {pipeline_mode = #tpu.pipeline_mode<synchronous>, transform_indices = @transform_13, window_bounds = array<i64: 1, 32>}, {pipeline_mode = #tpu.pipeline_mode<synchronous>, transform_indices = @transform_14, window_bounds = array<i64: 64, 96>}, {pipeline_mode = #tpu.pipeline_mode<synchronous>, transform_indices = @transform_15, window_bounds = array<i64: 64, 32>}, {transform_indices = @transform_16, window_bounds = array<i64: 1, 8, 32>}]} {
    %c0 = arith.constant 0 : index
    %c0_0 = arith.constant 0 : index
    %c0_1 = arith.constant 0 : index
    %0 = vector.load %arg1[%c0, %c0_0, %c0_1] : memref<1x8x32xf32, #tpu.memory_space<vmem>>, vector<1x8x32xf32>
    %1 = vector.shape_cast %0 : vector<1x8x32xf32> to vector<8x32xf32>
    %cst = arith.constant dense<0.000000e+00> : vector<8xf32>
    %2 = vector.multi_reduction <add>, %1, %cst [1] : vector<8x32xf32> to vector<8xf32>
    %3 = vector.shape_cast %2 : vector<8xf32> to vector<8x1xf32>
    %cst_2 = arith.constant 3.200000e+01 : f32
    %4 = vector.broadcast %cst_2 : f32 to vector<8x1xf32>
    %5 = arith.divf %3, %4 : vector<8x1xf32>
    %6 = vector.broadcast %5 : vector<8x1xf32> to vector<8x32xf32>
    %7 = arith.subf %1, %6 : vector<8x32xf32>
    %8 = arith.mulf %7, %7 : vector<8x32xf32>
    %cst_3 = arith.constant dense<0.000000e+00> : vector<8xf32>
    %9 = vector.multi_reduction <add>, %8, %cst_3 [1] : vector<8x32xf32> to vector<8xf32>
    %10 = vector.shape_cast %9 : vector<8xf32> to vector<8x1xf32>
    %cst_4 = arith.constant 3.200000e+01 : f32
    %11 = vector.broadcast %cst_4 : f32 to vector<8x1xf32>
    %12 = arith.divf %10, %11 : vector<8x1xf32>
    %13 = vector.broadcast %5 : vector<8x1xf32> to vector<8x32xf32>
    %14 = arith.subf %1, %13 : vector<8x32xf32>
    %cst_5 = arith.constant 9.99999974E-6 : f32
    %15 = vector.broadcast %cst_5 : f32 to vector<8x1xf32>
    %16 = arith.addf %12, %15 : vector<8x1xf32>
    %17 = math.rsqrt %16 : vector<8x1xf32>
    %18 = vector.broadcast %17 : vector<8x1xf32> to vector<8x32xf32>
    %19 = arith.mulf %14, %18 : vector<8x32xf32>
    %c0_6 = arith.constant 0 : index
    %c0_7 = arith.constant 0 : index
    %20 = vector.load %arg2[%c0_6, %c0_7] : memref<1x32xf32, #tpu.memory_space<vmem>>, vector<1x32xf32>
    %21 = vector.broadcast %20 : vector<1x32xf32> to vector<8x32xf32>
    %22 = arith.mulf %19, %21 : vector<8x32xf32>
    %c0_8 = arith.constant 0 : index
    %c0_9 = arith.constant 0 : index
    %23 = vector.load %arg3[%c0_8, %c0_9] : memref<1x32xf32, #tpu.memory_space<vmem>>, vector<1x32xf32>
    %24 = vector.broadcast %23 : vector<1x32xf32> to vector<8x32xf32>
    %25 = arith.addf %22, %24 : vector<8x32xf32>
    %c1_i32 = arith.constant 1 : i32
    %26 = tpu.dynamic_rotate %25 by %c1_i32 dim 0 : vector<8x32xf32>, i32 -> vector<8x32xf32>
    %27 = tpu.iota {dimensions = array<i32: 0>} : vector<8x32xi32>
    %c0_i32 = arith.constant 0 : i32
    %28 = vector.broadcast %c0_i32 : i32 to vector<8x32xi32>
    %29 = arith.cmpi eq, %27, %28 : vector<8x32xi32>
    %cst_10 = arith.constant 0.000000e+00 : f32
    %30 = vector.broadcast %cst_10 : f32 to vector<8x32xf32>
    %31 = arith.select %29, %30, %26 : vector<8x32xi1>, vector<8x32xf32>
    %c0_11 = arith.constant 0 : index
    %c0_12 = arith.constant 0 : index
    %32 = vector.load %arg6[%c0_11, %c0_12] : memref<1x32xf32, #tpu.memory_space<vmem>>, vector<1x32xf32>
    %c0_13 = arith.constant 0 : index
    %c0_14 = arith.constant 0 : index
    %33 = vector.load %arg7[%c0_13, %c0_14] : memref<1x32xf32, #tpu.memory_space<vmem>>, vector<1x32xf32>
    %c0_15 = arith.constant 0 : index
    %c0_16 = arith.constant 0 : index
    %34 = vector.load %arg8[%c0_15, %c0_16] : memref<1x32xf32, #tpu.memory_space<vmem>>, vector<1x32xf32>
    %35 = vector.broadcast %32 : vector<1x32xf32> to vector<8x32xf32>
    %36 = arith.mulf %25, %35 : vector<8x32xf32>
    %cst_17 = arith.constant 1.000000e+00 : f32
    %37 = vector.broadcast %cst_17 : f32 to vector<1x32xf32>
    %38 = arith.subf %37, %32 : vector<1x32xf32>
    %39 = vector.broadcast %38 : vector<1x32xf32> to vector<8x32xf32>
    %40 = arith.mulf %31, %39 : vector<8x32xf32>
    %41 = arith.addf %36, %40 : vector<8x32xf32>
    %42 = vector.broadcast %33 : vector<1x32xf32> to vector<8x32xf32>
    %43 = arith.mulf %25, %42 : vector<8x32xf32>
    %cst_18 = arith.constant 1.000000e+00 : f32
    %44 = vector.broadcast %cst_18 : f32 to vector<1x32xf32>
    %45 = arith.subf %44, %33 : vector<1x32xf32>
    %46 = vector.broadcast %45 : vector<1x32xf32> to vector<8x32xf32>
    %47 = arith.mulf %31, %46 : vector<8x32xf32>
    %48 = arith.addf %43, %47 : vector<8x32xf32>
    %49 = vector.broadcast %34 : vector<1x32xf32> to vector<8x32xf32>
    %50 = arith.mulf %25, %49 : vector<8x32xf32>
    %cst_19 = arith.constant 1.000000e+00 : f32
    %51 = vector.broadcast %cst_19 : f32 to vector<1x32xf32>
    %52 = arith.subf %51, %34 : vector<1x32xf32>
    %53 = vector.broadcast %52 : vector<1x32xf32> to vector<8x32xf32>
    %54 = arith.mulf %31, %53 : vector<8x32xf32>
    %55 = arith.addf %50, %54 : vector<8x32xf32>
    %56 = tpu.concatenate %41, %48, %55 in 1 : vector<8x32xf32>, vector<8x32xf32>, vector<8x32xf32> -> vector<8x96xf32>
    %c0_20 = arith.constant 0 : index
    %c0_21 = arith.constant 0 : index
    %57 = vector.load %arg11[%c0_20, %c0_21] : memref<96x96xf32, #tpu.memory_space<vmem>>, vector<96x96xf32>
    %cst_22 = arith.constant dense<0.000000e+00> : vector<8x96xf32>
    %58 = tpu.matmul %56, %57, %cst_22 {dimension_numbers = #tpu.dot_dimension_numbers<[1], [0], [0], [1], [0, 0, 1, 1], [], []>} : vector<8x96xf32>, vector<96x96xf32>, vector<8x96xf32> -> vector<8x96xf32>
    %59 = vector.extract_strided_slice %58 {offsets = [0, 0], sizes = [8, 32], strides = [1, 1]} : vector<8x96xf32> to vector<8x32xf32>
    %60 = vector.extract_strided_slice %58 {offsets = [0, 32], sizes = [8, 32], strides = [1, 1]} : vector<8x96xf32> to vector<8x32xf32>
    %61 = vector.extract_strided_slice %58 {offsets = [0, 64], sizes = [8, 32], strides = [1, 1]} : vector<8x96xf32> to vector<8x32xf32>
    %62 = arith.negf %61 : vector<8x32xf32>
    %63 = math.exp %62 : vector<8x32xf32>
    %cst_23 = arith.constant 1.000000e+00 : f32
    %64 = vector.broadcast %cst_23 : f32 to vector<8x32xf32>
    %65 = arith.addf %64, %63 : vector<8x32xf32>
    %66 = arith.divf %64, %65 : vector<8x32xf32>
    %c0_24 = arith.constant 0 : index
    %c0_25 = arith.constant 0 : index
    %67 = vector.load %arg9[%c0_24, %c0_25] : memref<1x32xf32, #tpu.memory_space<vmem>>, vector<1x32xf32>
    %68 = math.exp %67 : vector<1x32xf32>
    %cst_26 = arith.constant 0.000000e+00 : f32
    %69 = vector.broadcast %cst_26 : f32 to vector<1x32xf32>
    %70 = arith.subf %69, %68 : vector<1x32xf32>
    %c0_27 = arith.constant 0 : index
    %c0_28 = arith.constant 0 : index
    %71 = vector.load %arg10[%c0_27, %c0_28] : memref<1x32xf32, #tpu.memory_space<vmem>>, vector<1x32xf32>
    %cst_29 = arith.constant 0.000000e+00 : f32
    %72 = vector.broadcast %cst_29 : f32 to vector<1x32xf32>
    %cst_30 = arith.constant 0.000000e+00 : f32
    %73 = vector.broadcast %cst_30 : f32 to vector<1x32xf32>
    %cst_31 = arith.constant -9.99999968E+37 : f32
    %74 = vector.broadcast %cst_31 : f32 to vector<1x32xf32>
    %75 = vector.extract_strided_slice %59 {offsets = [0, 0], sizes = [1, 32], strides = [1, 1]} : vector<8x32xf32> to vector<1x32xf32>
    %76 = vector.extract_strided_slice %60 {offsets = [0, 0], sizes = [1, 32], strides = [1, 1]} : vector<8x32xf32> to vector<1x32xf32>
    %77 = arith.addf %71, %75 : vector<1x32xf32>
    %78 = arith.maximumf %74, %77 : vector<1x32xf32>
    %79 = arith.subf %74, %78 : vector<1x32xf32>
    %80 = math.exp %79 : vector<1x32xf32>
    %81 = arith.subf %77, %78 : vector<1x32xf32>
    %82 = math.exp %81 : vector<1x32xf32>
    %83 = arith.mulf %80, %72 : vector<1x32xf32>
    %84 = arith.mulf %82, %76 : vector<1x32xf32>
    %85 = arith.addf %83, %84 : vector<1x32xf32>
    %86 = arith.mulf %80, %73 : vector<1x32xf32>
    %87 = arith.addf %86, %82 : vector<1x32xf32>
    %88 = arith.divf %85, %87 : vector<1x32xf32>
    %89 = arith.addf %70, %74 : vector<1x32xf32>
    %90 = arith.maximumf %89, %75 : vector<1x32xf32>
    %91 = arith.subf %89, %90 : vector<1x32xf32>
    %92 = math.exp %91 : vector<1x32xf32>
    %93 = arith.subf %75, %90 : vector<1x32xf32>
    %94 = math.exp %93 : vector<1x32xf32>
    %95 = arith.mulf %92, %72 : vector<1x32xf32>
    %96 = arith.mulf %94, %76 : vector<1x32xf32>
    %97 = arith.addf %95, %96 : vector<1x32xf32>
    %98 = arith.mulf %92, %73 : vector<1x32xf32>
    %99 = arith.addf %98, %94 : vector<1x32xf32>
    %100 = vector.extract_strided_slice %59 {offsets = [1, 0], sizes = [1, 32], strides = [1, 1]} : vector<8x32xf32> to vector<1x32xf32>
    %101 = vector.extract_strided_slice %60 {offsets = [1, 0], sizes = [1, 32], strides = [1, 1]} : vector<8x32xf32> to vector<1x32xf32>
    %102 = arith.addf %71, %100 : vector<1x32xf32>
    %103 = arith.maximumf %90, %102 : vector<1x32xf32>
    %104 = arith.subf %90, %103 : vector<1x32xf32>
    %105 = math.exp %104 : vector<1x32xf32>
    %106 = arith.subf %102, %103 : vector<1x32xf32>
    %107 = math.exp %106 : vector<1x32xf32>
    %108 = arith.mulf %105, %97 : vector<1x32xf32>
    %109 = arith.mulf %107, %101 : vector<1x32xf32>
    %110 = arith.addf %108, %109 : vector<1x32xf32>
    %111 = arith.mulf %105, %99 : vector<1x32xf32>
    %112 = arith.addf %111, %107 : vector<1x32xf32>
    %113 = arith.divf %110, %112 : vector<1x32xf32>
    %114 = arith.addf %70, %90 : vector<1x32xf32>
    %115 = arith.maximumf %114, %100 : vector<1x32xf32>
    %116 = arith.subf %114, %115 : vector<1x32xf32>
    %117 = math.exp %116 : vector<1x32xf32>
    %118 = arith.subf %100, %115 : vector<1x32xf32>
    %119 = math.exp %118 : vector<1x32xf32>
    %120 = arith.mulf %117, %97 : vector<1x32xf32>
    %121 = arith.mulf %119, %101 : vector<1x32xf32>
    %122 = arith.addf %120, %121 : vector<1x32xf32>
    %123 = arith.mulf %117, %99 : vector<1x32xf32>
    %124 = arith.addf %123, %119 : vector<1x32xf32>
    %125 = vector.extract_strided_slice %59 {offsets = [2, 0], sizes = [1, 32], strides = [1, 1]} : vector<8x32xf32> to vector<1x32xf32>
    %126 = vector.extract_strided_slice %60 {offsets = [2, 0], sizes = [1, 32], strides = [1, 1]} : vector<8x32xf32> to vector<1x32xf32>
    %127 = arith.addf %71, %125 : vector<1x32xf32>
    %128 = arith.maximumf %115, %127 : vector<1x32xf32>
    %129 = arith.subf %115, %128 : vector<1x32xf32>
    %130 = math.exp %129 : vector<1x32xf32>
    %131 = arith.subf %127, %128 : vector<1x32xf32>
    %132 = math.exp %131 : vector<1x32xf32>
    %133 = arith.mulf %130, %122 : vector<1x32xf32>
    %134 = arith.mulf %132, %126 : vector<1x32xf32>
    %135 = arith.addf %133, %134 : vector<1x32xf32>
    %136 = arith.mulf %130, %124 : vector<1x32xf32>
    %137 = arith.addf %136, %132 : vector<1x32xf32>
    %138 = arith.divf %135, %137 : vector<1x32xf32>
    %139 = arith.addf %70, %115 : vector<1x32xf32>
    %140 = arith.maximumf %139, %125 : vector<1x32xf32>
    %141 = arith.subf %139, %140 : vector<1x32xf32>
    %142 = math.exp %141 : vector<1x32xf32>
    %143 = arith.subf %125, %140 : vector<1x32xf32>
    %144 = math.exp %143 : vector<1x32xf32>
    %145 = arith.mulf %142, %122 : vector<1x32xf32>
    %146 = arith.mulf %144, %126 : vector<1x32xf32>
    %147 = arith.addf %145, %146 : vector<1x32xf32>
    %148 = arith.mulf %142, %124 : vector<1x32xf32>
    %149 = arith.addf %148, %144 : vector<1x32xf32>
    %150 = vector.extract_strided_slice %59 {offsets = [3, 0], sizes = [1, 32], strides = [1, 1]} : vector<8x32xf32> to vector<1x32xf32>
    %151 = vector.extract_strided_slice %60 {offsets = [3, 0], sizes = [1, 32], strides = [1, 1]} : vector<8x32xf32> to vector<1x32xf32>
    %152 = arith.addf %71, %150 : vector<1x32xf32>
    %153 = arith.maximumf %140, %152 : vector<1x32xf32>
    %154 = arith.subf %140, %153 : vector<1x32xf32>
    %155 = math.exp %154 : vector<1x32xf32>
    %156 = arith.subf %152, %153 : vector<1x32xf32>
    %157 = math.exp %156 : vector<1x32xf32>
    %158 = arith.mulf %155, %147 : vector<1x32xf32>
    %159 = arith.mulf %157, %151 : vector<1x32xf32>
    %160 = arith.addf %158, %159 : vector<1x32xf32>
    %161 = arith.mulf %155, %149 : vector<1x32xf32>
    %162 = arith.addf %161, %157 : vector<1x32xf32>
    %163 = arith.divf %160, %162 : vector<1x32xf32>
    %164 = arith.addf %70, %140 : vector<1x32xf32>
    %165 = arith.maximumf %164, %150 : vector<1x32xf32>
    %166 = arith.subf %164, %165 : vector<1x32xf32>
    %167 = math.exp %166 : vector<1x32xf32>
    %168 = arith.subf %150, %165 : vector<1x32xf32>
    %169 = math.exp %168 : vector<1x32xf32>
    %170 = arith.mulf %167, %147 : vector<1x32xf32>
    %171 = arith.mulf %169, %151 : vector<1x32xf32>
    %172 = arith.addf %170, %171 : vector<1x32xf32>
    %173 = arith.mulf %167, %149 : vector<1x32xf32>
    %174 = arith.addf %173, %169 : vector<1x32xf32>
    %175 = vector.extract_strided_slice %59 {offsets = [4, 0], sizes = [1, 32], strides = [1, 1]} : vector<8x32xf32> to vector<1x32xf32>
    %176 = vector.extract_strided_slice %60 {offsets = [4, 0], sizes = [1, 32], strides = [1, 1]} : vector<8x32xf32> to vector<1x32xf32>
    %177 = arith.addf %71, %175 : vector<1x32xf32>
    %178 = arith.maximumf %165, %177 : vector<1x32xf32>
    %179 = arith.subf %165, %178 : vector<1x32xf32>
    %180 = math.exp %179 : vector<1x32xf32>
    %181 = arith.subf %177, %178 : vector<1x32xf32>
    %182 = math.exp %181 : vector<1x32xf32>
    %183 = arith.mulf %180, %172 : vector<1x32xf32>
    %184 = arith.mulf %182, %176 : vector<1x32xf32>
    %185 = arith.addf %183, %184 : vector<1x32xf32>
    %186 = arith.mulf %180, %174 : vector<1x32xf32>
    %187 = arith.addf %186, %182 : vector<1x32xf32>
    %188 = arith.divf %185, %187 : vector<1x32xf32>
    %189 = arith.addf %70, %165 : vector<1x32xf32>
    %190 = arith.maximumf %189, %175 : vector<1x32xf32>
    %191 = arith.subf %189, %190 : vector<1x32xf32>
    %192 = math.exp %191 : vector<1x32xf32>
    %193 = arith.subf %175, %190 : vector<1x32xf32>
    %194 = math.exp %193 : vector<1x32xf32>
    %195 = arith.mulf %192, %172 : vector<1x32xf32>
    %196 = arith.mulf %194, %176 : vector<1x32xf32>
    %197 = arith.addf %195, %196 : vector<1x32xf32>
    %198 = arith.mulf %192, %174 : vector<1x32xf32>
    %199 = arith.addf %198, %194 : vector<1x32xf32>
    %200 = vector.extract_strided_slice %59 {offsets = [5, 0], sizes = [1, 32], strides = [1, 1]} : vector<8x32xf32> to vector<1x32xf32>
    %201 = vector.extract_strided_slice %60 {offsets = [5, 0], sizes = [1, 32], strides = [1, 1]} : vector<8x32xf32> to vector<1x32xf32>
    %202 = arith.addf %71, %200 : vector<1x32xf32>
    %203 = arith.maximumf %190, %202 : vector<1x32xf32>
    %204 = arith.subf %190, %203 : vector<1x32xf32>
    %205 = math.exp %204 : vector<1x32xf32>
    %206 = arith.subf %202, %203 : vector<1x32xf32>
    %207 = math.exp %206 : vector<1x32xf32>
    %208 = arith.mulf %205, %197 : vector<1x32xf32>
    %209 = arith.mulf %207, %201 : vector<1x32xf32>
    %210 = arith.addf %208, %209 : vector<1x32xf32>
    %211 = arith.mulf %205, %199 : vector<1x32xf32>
    %212 = arith.addf %211, %207 : vector<1x32xf32>
    %213 = arith.divf %210, %212 : vector<1x32xf32>
    %214 = arith.addf %70, %190 : vector<1x32xf32>
    %215 = arith.maximumf %214, %200 : vector<1x32xf32>
    %216 = arith.subf %214, %215 : vector<1x32xf32>
    %217 = math.exp %216 : vector<1x32xf32>
    %218 = arith.subf %200, %215 : vector<1x32xf32>
    %219 = math.exp %218 : vector<1x32xf32>
    %220 = arith.mulf %217, %197 : vector<1x32xf32>
    %221 = arith.mulf %219, %201 : vector<1x32xf32>
    %222 = arith.addf %220, %221 : vector<1x32xf32>
    %223 = arith.mulf %217, %199 : vector<1x32xf32>
    %224 = arith.addf %223, %219 : vector<1x32xf32>
    %225 = vector.extract_strided_slice %59 {offsets = [6, 0], sizes = [1, 32], strides = [1, 1]} : vector<8x32xf32> to vector<1x32xf32>
    %226 = vector.extract_strided_slice %60 {offsets = [6, 0], sizes = [1, 32], strides = [1, 1]} : vector<8x32xf32> to vector<1x32xf32>
    %227 = arith.addf %71, %225 : vector<1x32xf32>
    %228 = arith.maximumf %215, %227 : vector<1x32xf32>
    %229 = arith.subf %215, %228 : vector<1x32xf32>
    %230 = math.exp %229 : vector<1x32xf32>
    %231 = arith.subf %227, %228 : vector<1x32xf32>
    %232 = math.exp %231 : vector<1x32xf32>
    %233 = arith.mulf %230, %222 : vector<1x32xf32>
    %234 = arith.mulf %232, %226 : vector<1x32xf32>
    %235 = arith.addf %233, %234 : vector<1x32xf32>
    %236 = arith.mulf %230, %224 : vector<1x32xf32>
    %237 = arith.addf %236, %232 : vector<1x32xf32>
    %238 = arith.divf %235, %237 : vector<1x32xf32>
    %239 = arith.addf %70, %215 : vector<1x32xf32>
    %240 = arith.maximumf %239, %225 : vector<1x32xf32>
    %241 = arith.subf %239, %240 : vector<1x32xf32>
    %242 = math.exp %241 : vector<1x32xf32>
    %243 = arith.subf %225, %240 : vector<1x32xf32>
    %244 = math.exp %243 : vector<1x32xf32>
    %245 = arith.mulf %242, %222 : vector<1x32xf32>
    %246 = arith.mulf %244, %226 : vector<1x32xf32>
    %247 = arith.addf %245, %246 : vector<1x32xf32>
    %248 = arith.mulf %242, %224 : vector<1x32xf32>
    %249 = arith.addf %248, %244 : vector<1x32xf32>
    %250 = vector.extract_strided_slice %59 {offsets = [7, 0], sizes = [1, 32], strides = [1, 1]} : vector<8x32xf32> to vector<1x32xf32>
    %251 = vector.extract_strided_slice %60 {offsets = [7, 0], sizes = [1, 32], strides = [1, 1]} : vector<8x32xf32> to vector<1x32xf32>
    %252 = arith.addf %71, %250 : vector<1x32xf32>
    %253 = arith.maximumf %240, %252 : vector<1x32xf32>
    %254 = arith.subf %240, %253 : vector<1x32xf32>
    %255 = math.exp %254 : vector<1x32xf32>
    %256 = arith.subf %252, %253 : vector<1x32xf32>
    %257 = math.exp %256 : vector<1x32xf32>
    %258 = arith.mulf %255, %247 : vector<1x32xf32>
    %259 = arith.mulf %257, %251 : vector<1x32xf32>
    %260 = arith.addf %258, %259 : vector<1x32xf32>
    %261 = arith.mulf %255, %249 : vector<1x32xf32>
    %262 = arith.addf %261, %257 : vector<1x32xf32>
    %263 = arith.divf %260, %262 : vector<1x32xf32>
    %264 = tpu.concatenate %88, %113, %138, %163, %188, %213, %238, %263 in 0 : vector<1x32xf32>, vector<1x32xf32>, vector<1x32xf32>, vector<1x32xf32>, vector<1x32xf32>, vector<1x32xf32>, vector<1x32xf32>, vector<1x32xf32> -> vector<8x32xf32>
    %265 = arith.mulf %66, %264 : vector<8x32xf32>
    %c0_32 = arith.constant 0 : index
    %c0_33 = arith.constant 0 : index
    %266 = vector.load %arg12[%c0_32, %c0_33] : memref<32x32xf32, #tpu.memory_space<vmem>>, vector<32x32xf32>
    %cst_34 = arith.constant dense<0.000000e+00> : vector<8x32xf32>
    %267 = tpu.matmul %265, %266, %cst_34 {dimension_numbers = #tpu.dot_dimension_numbers<[1], [0], [0], [1], [0, 0, 1, 1], [], []>} : vector<8x32xf32>, vector<32x32xf32>, vector<8x32xf32> -> vector<8x32xf32>
    %268 = arith.addf %1, %267 : vector<8x32xf32>
    %cst_35 = arith.constant dense<0.000000e+00> : vector<8xf32>
    %269 = vector.multi_reduction <add>, %268, %cst_35 [1] : vector<8x32xf32> to vector<8xf32>
    %270 = vector.shape_cast %269 : vector<8xf32> to vector<8x1xf32>
    %cst_36 = arith.constant 3.200000e+01 : f32
    %271 = vector.broadcast %cst_36 : f32 to vector<8x1xf32>
    %272 = arith.divf %270, %271 : vector<8x1xf32>
    %273 = vector.broadcast %272 : vector<8x1xf32> to vector<8x32xf32>
    %274 = arith.subf %268, %273 : vector<8x32xf32>
    %275 = arith.mulf %274, %274 : vector<8x32xf32>
    %cst_37 = arith.constant dense<0.000000e+00> : vector<8xf32>
    %276 = vector.multi_reduction <add>, %275, %cst_37 [1] : vector<8x32xf32> to vector<8xf32>
    %277 = vector.shape_cast %276 : vector<8xf32> to vector<8x1xf32>
    %cst_38 = arith.constant 3.200000e+01 : f32
    %278 = vector.broadcast %cst_38 : f32 to vector<8x1xf32>
    %279 = arith.divf %277, %278 : vector<8x1xf32>
    %280 = vector.broadcast %272 : vector<8x1xf32> to vector<8x32xf32>
    %281 = arith.subf %268, %280 : vector<8x32xf32>
    %cst_39 = arith.constant 9.99999974E-6 : f32
    %282 = vector.broadcast %cst_39 : f32 to vector<8x1xf32>
    %283 = arith.addf %279, %282 : vector<8x1xf32>
    %284 = math.rsqrt %283 : vector<8x1xf32>
    %285 = vector.broadcast %284 : vector<8x1xf32> to vector<8x32xf32>
    %286 = arith.mulf %281, %285 : vector<8x32xf32>
    %c0_40 = arith.constant 0 : index
    %c0_41 = arith.constant 0 : index
    %287 = vector.load %arg4[%c0_40, %c0_41] : memref<1x32xf32, #tpu.memory_space<vmem>>, vector<1x32xf32>
    %288 = vector.broadcast %287 : vector<1x32xf32> to vector<8x32xf32>
    %289 = arith.mulf %286, %288 : vector<8x32xf32>
    %c0_42 = arith.constant 0 : index
    %c0_43 = arith.constant 0 : index
    %290 = vector.load %arg5[%c0_42, %c0_43] : memref<1x32xf32, #tpu.memory_space<vmem>>, vector<1x32xf32>
    %291 = vector.broadcast %290 : vector<1x32xf32> to vector<8x32xf32>
    %292 = arith.addf %289, %291 : vector<8x32xf32>
    %c1_i32_44 = arith.constant 1 : i32
    %293 = tpu.dynamic_rotate %292 by %c1_i32_44 dim 0 : vector<8x32xf32>, i32 -> vector<8x32xf32>
    %294 = tpu.iota {dimensions = array<i32: 0>} : vector<8x32xi32>
    %c0_i32_45 = arith.constant 0 : i32
    %295 = vector.broadcast %c0_i32_45 : i32 to vector<8x32xi32>
    %296 = arith.cmpi eq, %294, %295 : vector<8x32xi32>
    %cst_46 = arith.constant 0.000000e+00 : f32
    %297 = vector.broadcast %cst_46 : f32 to vector<8x32xf32>
    %298 = arith.select %296, %297, %293 : vector<8x32xi1>, vector<8x32xf32>
    %c0_47 = arith.constant 0 : index
    %c0_48 = arith.constant 0 : index
    %299 = vector.load %arg13[%c0_47, %c0_48] : memref<1x32xf32, #tpu.memory_space<vmem>>, vector<1x32xf32>
    %c0_49 = arith.constant 0 : index
    %c0_50 = arith.constant 0 : index
    %300 = vector.load %arg14[%c0_49, %c0_50] : memref<1x32xf32, #tpu.memory_space<vmem>>, vector<1x32xf32>
    %301 = vector.broadcast %299 : vector<1x32xf32> to vector<8x32xf32>
    %302 = arith.mulf %292, %301 : vector<8x32xf32>
    %cst_51 = arith.constant 1.000000e+00 : f32
    %303 = vector.broadcast %cst_51 : f32 to vector<1x32xf32>
    %304 = arith.subf %303, %299 : vector<1x32xf32>
    %305 = vector.broadcast %304 : vector<1x32xf32> to vector<8x32xf32>
    %306 = arith.mulf %298, %305 : vector<8x32xf32>
    %307 = arith.addf %302, %306 : vector<8x32xf32>
    %308 = vector.broadcast %300 : vector<1x32xf32> to vector<8x32xf32>
    %309 = arith.mulf %292, %308 : vector<8x32xf32>
    %cst_52 = arith.constant 1.000000e+00 : f32
    %310 = vector.broadcast %cst_52 : f32 to vector<1x32xf32>
    %311 = arith.subf %310, %300 : vector<1x32xf32>
    %312 = vector.broadcast %311 : vector<1x32xf32> to vector<8x32xf32>
    %313 = arith.mulf %298, %312 : vector<8x32xf32>
    %314 = arith.addf %309, %313 : vector<8x32xf32>
    %315 = tpu.concatenate %307, %314 in 1 : vector<8x32xf32>, vector<8x32xf32> -> vector<8x64xf32>
    %c0_53 = arith.constant 0 : index
    %c0_54 = arith.constant 0 : index
    %316 = vector.load %arg15[%c0_53, %c0_54] : memref<64x96xf32, #tpu.memory_space<vmem>>, vector<64x96xf32>
    %cst_55 = arith.constant dense<0.000000e+00> : vector<8x96xf32>
    %317 = tpu.matmul %315, %316, %cst_55 {dimension_numbers = #tpu.dot_dimension_numbers<[1], [0], [0], [1], [0, 0, 1, 1], [], []>} : vector<8x64xf32>, vector<64x96xf32>, vector<8x96xf32> -> vector<8x96xf32>
    %318 = vector.extract_strided_slice %317 {offsets = [0, 0], sizes = [8, 64], strides = [1, 1]} : vector<8x96xf32> to vector<8x64xf32>
    %cst_56 = arith.constant 0.000000e+00 : f32
    %319 = vector.broadcast %cst_56 : f32 to vector<8x64xf32>
    %320 = arith.maximumf %318, %319 : vector<8x64xf32>
    %321 = arith.mulf %320, %320 : vector<8x64xf32>
    %322 = vector.extract_strided_slice %317 {offsets = [0, 64], sizes = [8, 32], strides = [1, 1]} : vector<8x96xf32> to vector<8x32xf32>
    %323 = arith.negf %322 : vector<8x32xf32>
    %324 = math.exp %323 : vector<8x32xf32>
    %cst_57 = arith.constant 1.000000e+00 : f32
    %325 = vector.broadcast %cst_57 : f32 to vector<8x32xf32>
    %326 = arith.addf %325, %324 : vector<8x32xf32>
    %327 = arith.divf %325, %326 : vector<8x32xf32>
    %c0_58 = arith.constant 0 : index
    %c0_59 = arith.constant 0 : index
    %328 = vector.load %arg16[%c0_58, %c0_59] : memref<64x32xf32, #tpu.memory_space<vmem>>, vector<64x32xf32>
    %cst_60 = arith.constant dense<0.000000e+00> : vector<8x32xf32>
    %329 = tpu.matmul %321, %328, %cst_60 {dimension_numbers = #tpu.dot_dimension_numbers<[1], [0], [0], [1], [0, 0, 1, 1], [], []>} : vector<8x64xf32>, vector<64x32xf32>, vector<8x32xf32> -> vector<8x32xf32>
    %330 = arith.mulf %327, %329 : vector<8x32xf32>
    %331 = arith.addf %268, %330 : vector<8x32xf32>
    %c0_61 = arith.constant 0 : index
    %c0_62 = arith.constant 0 : index
    %c0_63 = arith.constant 0 : index
    %332 = vector.load %arg17[%c0_61, %c0_62, %c0_63] : memref<1x8x32xf32, #tpu.memory_space<vmem>>, vector<1x8x32xf32>
    %333 = vector.shape_cast %332 : vector<1x8x32xf32> to vector<8x32xf32>
    %334 = vector.shape_cast %331 : vector<8x32xf32> to vector<1x8x32xf32>
    tpu.vector_store %arg17[%c0_61, %c0_62, %c0_63], %334 {strides = array<i32>} : memref<1x8x32xf32, #tpu.memory_space<vmem>>, vector<1x8x32xf32>,
    return
  }
  func.func @transform_0(%arg0: i32) -> (i32, i32, i32) {
    %c0_i32 = arith.constant 0 : i32
    %c0_i32_0 = arith.constant 0 : i32
    %c0_i32_1 = arith.constant 0 : i32
    return %arg0, %c0_i32, %c0_i32_0 : i32, i32, i32
  }
  func.func @transform_1(%arg0: i32) -> (i32, i32) {
    %c0_i32 = arith.constant 0 : i32
    %c0_i32_0 = arith.constant 0 : i32
    %c0_i32_1 = arith.constant 0 : i32
    return %c0_i32, %c0_i32_0 : i32, i32
  }
  func.func @transform_2(%arg0: i32) -> (i32, i32) {
    %c0_i32 = arith.constant 0 : i32
    %c0_i32_0 = arith.constant 0 : i32
    %c0_i32_1 = arith.constant 0 : i32
    return %c0_i32, %c0_i32_0 : i32, i32
  }
  func.func @transform_3(%arg0: i32) -> (i32, i32) {
    %c0_i32 = arith.constant 0 : i32
    %c0_i32_0 = arith.constant 0 : i32
    %c0_i32_1 = arith.constant 0 : i32
    return %c0_i32, %c0_i32_0 : i32, i32
  }
  func.func @transform_4(%arg0: i32) -> (i32, i32) {
    %c0_i32 = arith.constant 0 : i32
    %c0_i32_0 = arith.constant 0 : i32
    %c0_i32_1 = arith.constant 0 : i32
    return %c0_i32, %c0_i32_0 : i32, i32
  }
  func.func @transform_5(%arg0: i32) -> (i32, i32) {
    %c0_i32 = arith.constant 0 : i32
    %c0_i32_0 = arith.constant 0 : i32
    %c0_i32_1 = arith.constant 0 : i32
    return %c0_i32, %c0_i32_0 : i32, i32
  }
  func.func @transform_6(%arg0: i32) -> (i32, i32) {
    %c0_i32 = arith.constant 0 : i32
    %c0_i32_0 = arith.constant 0 : i32
    %c0_i32_1 = arith.constant 0 : i32
    return %c0_i32, %c0_i32_0 : i32, i32
  }
  func.func @transform_7(%arg0: i32) -> (i32, i32) {
    %c0_i32 = arith.constant 0 : i32
    %c0_i32_0 = arith.constant 0 : i32
    %c0_i32_1 = arith.constant 0 : i32
    return %c0_i32, %c0_i32_0 : i32, i32
  }
  func.func @transform_8(%arg0: i32) -> (i32, i32) {
    %c0_i32 = arith.constant 0 : i32
    %c0_i32_0 = arith.constant 0 : i32
    %c0_i32_1 = arith.constant 0 : i32
    return %c0_i32, %c0_i32_0 : i32, i32
  }
  func.func @transform_9(%arg0: i32) -> (i32, i32) {
    %c0_i32 = arith.constant 0 : i32
    %c0_i32_0 = arith.constant 0 : i32
    %c0_i32_1 = arith.constant 0 : i32
    return %c0_i32, %c0_i32_0 : i32, i32
  }
  func.func @transform_10(%arg0: i32) -> (i32, i32) {
    %c0_i32 = arith.constant 0 : i32
    %c0_i32_0 = arith.constant 0 : i32
    %c0_i32_1 = arith.constant 0 : i32
    return %c0_i32, %c0_i32_0 : i32, i32
  }
  func.func @transform_11(%arg0: i32) -> (i32, i32) {
    %c0_i32 = arith.constant 0 : i32
    %c0_i32_0 = arith.constant 0 : i32
    %c0_i32_1 = arith.constant 0 : i32
    return %c0_i32, %c0_i32_0 : i32, i32
  }
  func.func @transform_12(%arg0: i32) -> (i32, i32) {
    %c0_i32 = arith.constant 0 : i32
    %c0_i32_0 = arith.constant 0 : i32
    %c0_i32_1 = arith.constant 0 : i32
    return %c0_i32, %c0_i32_0 : i32, i32
  }
  func.func @transform_13(%arg0: i32) -> (i32, i32) {
    %c0_i32 = arith.constant 0 : i32
    %c0_i32_0 = arith.constant 0 : i32
    %c0_i32_1 = arith.constant 0 : i32
    return %c0_i32, %c0_i32_0 : i32, i32
  }
  func.func @transform_14(%arg0: i32) -> (i32, i32) {
    %c0_i32 = arith.constant 0 : i32
    %c0_i32_0 = arith.constant 0 : i32
    %c0_i32_1 = arith.constant 0 : i32
    return %c0_i32, %c0_i32_0 : i32, i32
  }
  func.func @transform_15(%arg0: i32) -> (i32, i32) {
    %c0_i32 = arith.constant 0 : i32
    %c0_i32_0 = arith.constant 0 : i32
    %c0_i32_1 = arith.constant 0 : i32
    return %c0_i32, %c0_i32_0 : i32, i32
  }
  func.func @transform_16(%arg0: i32) -> (i32, i32, i32) {
    %c0_i32 = arith.constant 0 : i32
    %c0_i32_0 = arith.constant 0 : i32
    %c0_i32_1 = arith.constant 0 : i32
    return %arg0, %c0_i32, %c0_i32_0 : i32, i32, i32
  }
}

</mosaic_0001>

<llo_original>
// kernel: tpu_custom_call.1
$region0: #{tpu_custom_call.1}
  #allocation0 [shape = 'u32[]', space=smem, size = 0x4, offset = 0x4, fixed_abs, tag = 'smem constant byte address 0x4 - core index']
  #allocation1 [shape = 'u32[144,128]{1,0:T(1,128)}', space=vmem, size = 0x12000, scoped, tag = 'internal scratch']
  %s0 = inlined_call_operand.vmem [shape: f32[2,8,32], index: 0, kind: input, shape index: {}]
  %s1 = inlined_call_operand.vmem [shape: f32[1,32], index: 1, kind: input, shape index: {}]
  %s2 = inlined_call_operand.vmem [shape: f32[1,32], index: 2, kind: input, shape index: {}]
  %s3 = inlined_call_operand.hbm [shape: f32[1,32], index: 3, kind: input, shape index: {}]
  %s4 = inlined_call_operand.hbm [shape: f32[1,32], index: 4, kind: input, shape index: {}]
  %s5 = inlined_call_operand.hbm [shape: f32[1,32], index: 5, kind: input, shape index: {}]
  %s6 = inlined_call_operand.hbm [shape: f32[1,32], index: 6, kind: input, shape index: {}]
  %s7 = inlined_call_operand.hbm [shape: f32[1,32], index: 7, kind: input, shape index: {}]
  %s8 = inlined_call_operand.hbm [shape: f32[1,32], index: 8, kind: input, shape index: {}]
  %s9 = inlined_call_operand.hbm [shape: f32[1,32], index: 9, kind: input, shape index: {}]
  %s10 = inlined_call_operand.vmem [shape: f32[96,96], index: 10, kind: input, shape index: {}]
  %s11 = inlined_call_operand.hbm [shape: f32[32,32], index: 11, kind: input, shape index: {}]
  %s12 = inlined_call_operand.vmem [shape: f32[1,32], index: 12, kind: input, shape index: {}]
  %s13 = inlined_call_operand.vmem [shape: f32[1,32], index: 13, kind: input, shape index: {}]
  %s14 = inlined_call_operand.hbm [shape: f32[64,96], index: 14, kind: input, shape index: {}]
  %s15 = inlined_call_operand.vmem [shape: f32[64,32], index: 15, kind: input, shape index: {}]
  %s16 = inlined_call_operand.hbm [shape: f32[2,8,32], index: 16, kind: output, shape index: {}]
  %s17 = sld [smem:[#allocation0]]
  $region133: #{tpu_custom_call.1} parent=0
    _
  %s19 = ssub.s32 1, %s17
  %s20 = scalar_select 0, %s19, %s17
  $region1: #{tpu_custom_call.1} parent=0
    #allocation2 [shape = 'u8[512]{0}', space=vmem, size = 0x400, scoped, tag = 'input window, operand 3, single buffered']
    #allocation3 [shape = 's32[2]{0}', space=sflag, size = 0x8, scoped, tag = 'scoped memory for tpu_custom_call.1']
    #allocation4 [shape = 's32[2]{0}', space=sflag, size = 0x8, scoped, tag = 'scoped memory for tpu_custom_call.1']
    #allocation5 [shape = 'u8[512]{0}', space=vmem, size = 0x400, scoped, tag = 'input window, operand 4, single buffered']
    #allocation6 [shape = 's32[1]{0}', space=sflag, size = 0x4, scoped, tag = 'scoped memory for tpu_custom_call.1']
    #allocation7 [shape = 'u8[512]{0}', space=vmem, size = 0x400, scoped, tag = 'input window, operand 5, single buffered']
    #allocation8 [shape = 'u8[512]{0}', space=vmem, size = 0x400, scoped, tag = 'input window, operand 6, single buffered']
    #allocation9 [shape = 's32[1]{0}', space=sflag, size = 0x4, scoped, tag = 'scoped memory for tpu_custom_call.1']
    #allocation10 [shape = 'u8[512]{0}', space=vmem, size = 0x400, scoped, tag = 'input window, operand 7, single buffered']
    #allocation11 [shape = 'u8[512]{0}', space=vmem, size = 0x400, scoped, tag = 'input window, operand 8, single buffered']
    #allocation12 [shape = 's32[1]{0}', space=sflag, size = 0x4, scoped, tag = 'scoped memory for tpu_custom_call.1']
    #allocation13 [shape = 'u8[512]{0}', space=vmem, size = 0x400, scoped, tag = 'input window, operand 9, single buffered']
    #allocation14 [shape = 'u8[16384]{0}', space=vmem, size = 0x4000, scoped, tag = 'input window, operand 11, single buffered']
    #allocation15 [shape = 's32[1]{0}', space=sflag, size = 0x4, scoped, tag = 'scoped memory for tpu_custom_call.1']
    #allocation16 [shape = 'u8[32768]{0}', space=vmem, size = 0x8000, scoped, tag = 'input window, operand 14, single buffered']
    #allocation17 [shape = 'u8[8192]{0}', space=vmem, size = 0x2000, scoped, tag = 'output window, operand 0']
    %21 = vsyncpa [#allocation3], 0
    %22 = vsyncpa [#allocation6], 0
    %23 = vsyncpa [#allocation9], 0
    %24 = vsyncpa [#allocation12], 0
    %25 = vsyncpa [#allocation15], 0
    %26 = vsyncpa [#allocation4], 0
    %s27 = scalar_lea.sflag [#allocation4], 1
    %28 = vsyncpa %s27, 0
    loop: start=0, step=1, limit=4
    $region2: #{tpu_custom_call.1} parent=1 // loop_pre_header
      _
    $region3: #{tpu_custom_call.1} parent=1 // loop_header
      %s30 = sphi 0, %s34
      %p31 = scmp.ge.s32.totalorder %s30, 4
      %s40 = sphi 0, %s42
      %s43 = sphi 0, %s40
      %s44 = sphi 0, %s43
      %s60 = sphi 0, %s44
      %s64 = sphi 0, %s64
      %s66 = sphi 0, %s64
      %s67 = sphi 0, %s66
      %s81 = sphi 0, %s67
      %s85 = sphi 0, %s85
      %s87 = sphi 0, %s85
      %s88 = sphi 0, %s87
      %s102 = sphi 0, %s88
      %s106 = sphi 0, %s106
      %s108 = sphi 0, %s106
      %s109 = sphi 0, %s108
      %s123 = sphi 0, %s109
      %s127 = sphi 0, %s127
      %s129 = sphi 0, %s127
      %s130 = sphi 0, %s129
      %s144 = sphi 0, %s130
      %s148 = sphi 0, %s148
      %s150 = sphi 0, %s148
      %s151 = sphi 0, %s150
      %s165 = sphi 0, %s151
      %s169 = sphi 0, %s169
      %s171 = sphi 0, %s169
      %s172 = sphi 0, %s171
      %s186 = sphi 0, %s172
      %s190 = sphi 0, %s190
      %s192 = sphi 0, %s190
      %s193 = sphi 0, %s192
      %s207 = sphi 0, %s193
      %s211 = sphi 0, %s211
      %s213 = sphi 0, %s211
      %s214 = sphi 0, %s213
      %s228 = sphi 0, %s214
      %s232 = sphi 0, %s232
      %s234 = sphi 0, %s232
      %s235 = sphi 0, %s234
      %s249 = sphi 0, %s235
      %s253 = sphi 0, %s253
      %s255 = sphi 0, %s253
      %s256 = sphi 0, %s255
      %s270 = sphi 0, %s256
      %s274 = sphi 0, %s274
      %s276 = sphi 0, %s274
      %s277 = sphi 0, %s276
      %s291 = sphi 0, %s277
      %s295 = sphi 0, %s295
      %s297 = sphi 0, %s295
      %s298 = sphi 0, %s297
      %s312 = sphi 0, %s298
      %s316 = sphi 0, %s316
      %s318 = sphi 0, %s316
      %s319 = sphi 0, %s318
      %s333 = sphi 0, %s319
      %s337 = sphi 0, %s337
      %s339 = sphi 0, %s337
      %s340 = sphi 0, %s339
      %s354 = sphi 0, %s340
      %s358 = sphi 0, %s358
      %s360 = sphi 0, %s358
      %s361 = sphi 0, %s360
      %s375 = sphi 0, %s361
      %s381 = sphi 0, %s383
      %s384 = sphi 0, %s381
      %s385 = sphi 0, %s384
      %s401 = sphi 0, %s385
    $region4: #{tpu_custom_call.1} parent=1 // loop_header_branch
      %33 = sbr.rel (%p31) target = $region8
    $region5: #{tpu_custom_call.1} parent=1 // loop_body
      %s35 = ssub.s32 %s30, 1
      %s36 = ssub.s32 %s30, 2
      %s37 = sadd.s32 %s30, 1
      %s38 = ssub.s32 %s30, %s37
      %p39 = scmp.eq.s32.totalorder %s38, 0
      %s41 = sadd.s32 %s40, 1
      %s42 = scalar_select %p39, %s40, %s41
      %p45 = pneg %p39
      %p46 = scmp.eq.s32.totalorder %s30, 1
      %p47 = por %p45, %p46
      %p48 = scmp.ne.s32.totalorder %s40, %s43
      %p49 = scmp.eq.s32.totalorder %s30, 0
      %p50 = por %p48, %p49
      %p51 = scmp.ne.s32.totalorder %s40, %s43
      %p52 = scmp.eq.s32.totalorder %s35, 1
      %p53 = por %p51, %p52
      %p54 = scmp.ne.s32.totalorder %s43, %s44
      %p55 = scmp.eq.s32.totalorder %s35, 0
      %p56 = por %p54, %p55
      %p57 = scmp.ne.s32.totalorder %s43, %s44
      %p58 = scmp.eq.s32.totalorder %s36, 1
      %p59 = por %p57, %p58
      %p61 = scmp.ne.s32.totalorder %s44, %s60
      %p62 = scmp.eq.s32.totalorder %s36, 0
      %p63 = por %p61, %p62
      %s65 = sadd.s32 %s64, 1
      %p68 = scmp.eq.s32.totalorder %s30, 1
      %p69 = scmp.ne.s32.totalorder %s64, %s66
      %p70 = scmp.eq.s32.totalorder %s30, 0
      %p71 = por %p69, %p70
      %p72 = scmp.ne.s32.totalorder %s64, %s66
      %p73 = scmp.eq.s32.totalorder %s35, 1
      %p74 = por %p72, %p73
      %p75 = scmp.ne.s32.totalorder %s66, %s67
      %p76 = scmp.eq.s32.totalorder %s35, 0
      %p77 = por %p75, %p76
      %p78 = scmp.ne.s32.totalorder %s66, %s67
      %p79 = scmp.eq.s32.totalorder %s36, 1
      %p80 = por %p78, %p79
      %p82 = scmp.ne.s32.totalorder %s67, %s81
      %p83 = scmp.eq.s32.totalorder %s36, 0
      %p84 = por %p82, %p83
      %s86 = sadd.s32 %s85, 1
      %p89 = scmp.eq.s32.totalorder %s30, 1
      %p90 = scmp.ne.s32.totalorder %s85, %s87
      %p91 = scmp.eq.s32.totalorder %s30, 0
      %p92 = por %p90, %p91
      %p93 = scmp.ne.s32.totalorder %s85, %s87
      %p94 = scmp.eq.s32.totalorder %s35, 1
      %p95 = por %p93, %p94
      %p96 = scmp.ne.s32.totalorder %s87, %s88
      %p97 = scmp.eq.s32.totalorder %s35, 0
      %p98 = por %p96, %p97
      %p99 = scmp.ne.s32.totalorder %s87, %s88
      %p100 = scmp.eq.s32.totalorder %s36, 1
      %p101 = por %p99, %p100
      %p103 = scmp.ne.s32.totalorder %s88, %s102
      %p104 = scmp.eq.s32.totalorder %s36, 0
      %p105 = por %p103, %p104
      %s107 = sadd.s32 %s106, 1
      %p110 = scmp.eq.s32.totalorder %s30, 1
      %p111 = scmp.ne.s32.totalorder %s106, %s108
      %p112 = scmp.eq.s32.totalorder %s30, 0
      %p113 = por %p111, %p112
      %p114 = scmp.ne.s32.totalorder %s106, %s108
      %p115 = scmp.eq.s32.totalorder %s35, 1
      %p116 = por %p114, %p115
      %p117 = scmp.ne.s32.totalorder %s108, %s109
      %p118 = scmp.eq.s32.totalorder %s35, 0
      %p119 = por %p117, %p118
      %p120 = scmp.ne.s32.totalorder %s108, %s109
      %p121 = scmp.eq.s32.totalorder %s36, 1
      %p122 = por %p120, %p121
      %p124 = scmp.ne.s32.totalorder %s109, %s123
      %p125 = scmp.eq.s32.totalorder %s36, 0
      %p126 = por %p124, %p125
      %s128 = sadd.s32 %s127, 1
      %p131 = scmp.eq.s32.totalorder %s30, 1
      %p132 = scmp.ne.s32.totalorder %s127, %s129
      %p133 = scmp.eq.s32.totalorder %s30, 0
      %p134 = por %p132, %p133
      %p135 = scmp.ne.s32.totalorder %s127, %s129
      %p136 = scmp.eq.s32.totalorder %s35, 1
      %p137 = por %p135, %p136
      %p138 = scmp.ne.s32.totalorder %s129, %s130
      %p139 = scmp.eq.s32.totalorder %s35, 0
      %p140 = por %p138, %p139
      %p141 = scmp.ne.s32.totalorder %s129, %s130
      %p142 = scmp.eq.s32.totalorder %s36, 1
      %p143 = por %p141, %p142
      %p145 = scmp.ne.s32.totalorder %s130, %s144
      %p146 = scmp.eq.s32.totalorder %s36, 0
      %p147 = por %p145, %p146
      %s149 = sadd.s32 %s148, 1
      %p152 = scmp.eq.s32.totalorder %s30, 1
      %p153 = scmp.ne.s32.totalorder %s148, %s150
      %p154 = scmp.eq.s32.totalorder %s30, 0
      %p155 = por %p153, %p154
      %p156 = scmp.ne.s32.totalorder %s148, %s150
      %p157 = scmp.eq.s32.totalorder %s35, 1
      %p158 = por %p156, %p157
      %p159 = scmp.ne.s32.totalorder %s150, %s151
      %p160 = scmp.eq.s32.totalorder %s35, 0
      %p161 = por %p159, %p160
      %p162 = scmp.ne.s32.totalorder %s150, %s151
      %p163 = scmp.eq.s32.totalorder %s36, 1
      %p164 = por %p162, %p163
      %p166 = scmp.ne.s32.totalorder %s151, %s165
      %p167 = scmp.eq.s32.totalorder %s36, 0
      %p168 = por %p166, %p167
      %s170 = sadd.s32 %s169, 1
      %p173 = scmp.eq.s32.totalorder %s30, 1
      %p174 = scmp.ne.s32.totalorder %s169, %s171
      %p175 = scmp.eq.s32.totalorder %s30, 0
      %p176 = por %p174, %p175
      %p177 = scmp.ne.s32.totalorder %s169, %s171
      %p178 = scmp.eq.s32.totalorder %s35, 1
      %p179 = por %p177, %p178
      %p180 = scmp.ne.s32.totalorder %s171, %s172
      %p181 = scmp.eq.s32.totalorder %s35, 0
      %p182 = por %p180, %p181
      %p183 = scmp.ne.s32.totalorder %s171, %s172
      %p184 = scmp.eq.s32.totalorder %s36, 1
      %p185 = por %p183, %p184
      %p187 = scmp.ne.s32.totalorder %s172, %s186
      %p188 = scmp.eq.s32.totalorder %s36, 0
      %p189 = por %p187, %p188
      %s191 = sadd.s32 %s190, 1
      %p194 = scmp.eq.s32.totalorder %s30, 1
      %p195 = scmp.ne.s32.totalorder %s190, %s192
      %p196 = scmp.eq.s32.totalorder %s30, 0
      %p197 = por %p195, %p196
      %p198 = scmp.ne.s32.totalorder %s190, %s192
      %p199 = scmp.eq.s32.totalorder %s35, 1
      %p200 = por %p198, %p199
      %p201 = scmp.ne.s32.totalorder %s192, %s193
      %p202 = scmp.eq.s32.totalorder %s35, 0
      %p203 = por %p201, %p202
      %p204 = scmp.ne.s32.totalorder %s192, %s193
      %p205 = scmp.eq.s32.totalorder %s36, 1
      %p206 = por %p204, %p205
      %p208 = scmp.ne.s32.totalorder %s193, %s207
      %p209 = scmp.eq.s32.totalorder %s36, 0
      %p210 = por %p208, %p209
      %s212 = sadd.s32 %s211, 1
      %p215 = scmp.eq.s32.totalorder %s30, 1
      %p216 = scmp.ne.s32.totalorder %s211, %s213
      %p217 = scmp.eq.s32.totalorder %s30, 0
      %p218 = por %p216, %p217
      %p219 = scmp.ne.s32.totalorder %s211, %s213
      %p220 = scmp.eq.s32.totalorder %s35, 1
      %p221 = por %p219, %p220
      %p222 = scmp.ne.s32.totalorder %s213, %s214
      %p223 = scmp.eq.s32.totalorder %s35, 0
      %p224 = por %p222, %p223
      %p225 = scmp.ne.s32.totalorder %s213, %s214
      %p226 = scmp.eq.s32.totalorder %s36, 1
      %p227 = por %p225, %p226
      %p229 = scmp.ne.s32.totalorder %s214, %s228
      %p230 = scmp.eq.s32.totalorder %s36, 0
      %p231 = por %p229, %p230
      %s233 = sadd.s32 %s232, 1
      %p236 = scmp.eq.s32.totalorder %s30, 1
      %p237 = scmp.ne.s32.totalorder %s232, %s234
      %p238 = scmp.eq.s32.totalorder %s30, 0
      %p239 = por %p237, %p238
      %p240 = scmp.ne.s32.totalorder %s232, %s234
      %p241 = scmp.eq.s32.totalorder %s35, 1
      %p242 = por %p240, %p241
      %p243 = scmp.ne.s32.totalorder %s234, %s235
      %p244 = scmp.eq.s32.totalorder %s35, 0
      %p245 = por %p243, %p244
      %p246 = scmp.ne.s32.totalorder %s234, %s235
      %p247 = scmp.eq.s32.totalorder %s36, 1
      %p248 = por %p246, %p247
      %p250 = scmp.ne.s32.totalorder %s235, %s249
      %p251 = scmp.eq.s32.totalorder %s36, 0
      %p252 = por %p250, %p251
      %s254 = sadd.s32 %s253, 1
      %p257 = scmp.eq.s32.totalorder %s30, 1
      %p258 = scmp.ne.s32.totalorder %s253, %s255
      %p259 = scmp.eq.s32.totalorder %s30, 0
      %p260 = por %p258, %p259
      %p261 = scmp.ne.s32.totalorder %s253, %s255
      %p262 = scmp.eq.s32.totalorder %s35, 1
      %p263 = por %p261, %p262
      %p264 = scmp.ne.s32.totalorder %s255, %s256
      %p265 = scmp.eq.s32.totalorder %s35, 0
      %p266 = por %p264, %p265
      %p267 = scmp.ne.s32.totalorder %s255, %s256
      %p268 = scmp.eq.s32.totalorder %s36, 1
      %p269 = por %p267, %p268
      %p271 = scmp.ne.s32.totalorder %s256, %s270
      %p272 = scmp.eq.s32.totalorder %s36, 0
      %p273 = por %p271, %p272
      %s275 = sadd.s32 %s274, 1
      %p278 = scmp.eq.s32.totalorder %s30, 1
      %p279 = scmp.ne.s32.totalorder %s274, %s276
      %p280 = scmp.eq.s32.totalorder %s30, 0
      %p281 = por %p279, %p280
      %p282 = scmp.ne.s32.totalorder %s274, %s276
      %p283 = scmp.eq.s32.totalorder %s35, 1
      %p284 = por %p282, %p283
      %p285 = scmp.ne.s32.totalorder %s276, %s277
      %p286 = scmp.eq.s32.totalorder %s35, 0
      %p287 = por %p285, %p286
      %p288 = scmp.ne.s32.totalorder %s276, %s277
      %p289 = scmp.eq.s32.totalorder %s36, 1
      %p290 = por %p288, %p289
      %p292 = scmp.ne.s32.totalorder %s277, %s291
      %p293 = scmp.eq.s32.totalorder %s36, 0
      %p294 = por %p292, %p293
      %s296 = sadd.s32 %s295, 1
      %p299 = scmp.eq.s32.totalorder %s30, 1
      %p300 = scmp.ne.s32.totalorder %s295, %s297
      %p301 = scmp.eq.s32.totalorder %s30, 0
      %p302 = por %p300, %p301
      %p303 = scmp.ne.s32.totalorder %s295, %s297
      %p304 = scmp.eq.s32.totalorder %s35, 1
      %p305 = por %p303, %p304
      %p306 = scmp.ne.s32.totalorder %s297, %s298
      %p307 = scmp.eq.s32.totalorder %s35, 0
      %p308 = por %p306, %p307
      %p309 = scmp.ne.s32.totalorder %s297, %s298
      %p310 = scmp.eq.s32.totalorder %s36, 1
      %p311 = por %p309, %p310
      %p313 = scmp.ne.s32.totalorder %s298, %s312
      %p314 = scmp.eq.s32.totalorder %s36, 0
      %p315 = por %p313, %p314
      %s317 = sadd.s32 %s316, 1
      %p320 = scmp.eq.s32.totalorder %s30, 1
      %p321 = scmp.ne.s32.totalorder %s316, %s318
      %p322 = scmp.eq.s32.totalorder %s30, 0
      %p323 = por %p321, %p322
      %p324 = scmp.ne.s32.totalorder %s316, %s318
      %p325 = scmp.eq.s32.totalorder %s35, 1
      %p326 = por %p324, %p325
      %p327 = scmp.ne.s32.totalorder %s318, %s319
      %p328 = scmp.eq.s32.totalorder %s35, 0
      %p329 = por %p327, %p328
      %p330 = scmp.ne.s32.totalorder %s318, %s319
      %p331 = scmp.eq.s32.totalorder %s36, 1
      %p332 = por %p330, %p331
      %p334 = scmp.ne.s32.totalorder %s319, %s333
      %p335 = scmp.eq.s32.totalorder %s36, 0
      %p336 = por %p334, %p335
      %s338 = sadd.s32 %s337, 1
      %p341 = scmp.eq.s32.totalorder %s30, 1
      %p342 = scmp.ne.s32.totalorder %s337, %s339
      %p343 = scmp.eq.s32.totalorder %s30, 0
      %p344 = por %p342, %p343
      %p345 = scmp.ne.s32.totalorder %s337, %s339
      %p346 = scmp.eq.s32.totalorder %s35, 1
      %p347 = por %p345, %p346
      %p348 = scmp.ne.s32.totalorder %s339, %s340
      %p349 = scmp.eq.s32.totalorder %s35, 0
      %p350 = por %p348, %p349
      %p351 = scmp.ne.s32.totalorder %s339, %s340
      %p352 = scmp.eq.s32.totalorder %s36, 1
      %p353 = por %p351, %p352
      %p355 = scmp.ne.s32.totalorder %s340, %s354
      %p356 = scmp.eq.s32.totalorder %s36, 0
      %p357 = por %p355, %p356
      %s359 = sadd.s32 %s358, 1
      %p362 = scmp.eq.s32.totalorder %s30, 1
      %p363 = scmp.ne.s32.totalorder %s358, %s360
      %p364 = scmp.eq.s32.totalorder %s30, 0
      %p365 = por %p363, %p364
      %p366 = scmp.ne.s32.totalorder %s358, %s360
      %p367 = scmp.eq.s32.totalorder %s35, 1
      %p368 = por %p366, %p367
      %p369 = scmp.ne.s32.totalorder %s360, %s361
      %p370 = scmp.eq.s32.totalorder %s35, 0
      %p371 = por %p369, %p370
      %p372 = scmp.ne.s32.totalorder %s360, %s361
      %p373 = scmp.eq.s32.totalorder %s36, 1
      %p374 = por %p372, %p373
      %p376 = scmp.ne.s32.totalorder %s361, %s375
      %p377 = scmp.eq.s32.totalorder %s36, 0
      %p378 = por %p376, %p377
      %s379 = ssub.s32 %s30, %s37
      %p380 = scmp.eq.s32.totalorder %s379, 0
      %s382 = sadd.s32 %s381, 1
      %s383 = scalar_select %p380, %s381, %s382
      %p386 = pneg %p380
      %p387 = scmp.eq.s32.totalorder %s30, 1
      %p388 = por %p386, %p387
      %p389 = scmp.ne.s32.totalorder %s381, %s384
      %p390 = scmp.eq.s32.totalorder %s30, 0
      %p391 = por %p389, %p390
      %p392 = scmp.ne.s32.totalorder %s381, %s384
      %p393 = scmp.eq.s32.totalorder %s35, 1
      %p394 = por %p392, %p393
      %p395 = scmp.ne.s32.totalorder %s384, %s385
      %p396 = scmp.eq.s32.totalorder %s35, 0
      %p397 = por %p395, %p396
      %p398 = scmp.ne.s32.totalorder %s384, %s385
      %p399 = scmp.eq.s32.totalorder %s36, 1
      %p400 = por %p398, %p399
      %p402 = scmp.ne.s32.totalorder %s385, %s401
      %p403 = scmp.eq.s32.totalorder %s36, 0
      %p404 = por %p402, %p403
      %p405 = scmp.le.s32.totalorder 1, %s30
      %p406 = scmp.lt.s32.totalorder %s30, 3
      %p407 = pnand %p405, %p406
      %p408 = pneg %p407
      // Predicated region
      $region9: #{tpu_custom_call.1} parent=5 // pred_check
        _
      $region10: #{tpu_custom_call.1} parent=5 // pred_check_branch
        %410 = sbr.rel (%p407) target = $region12
      $region11: #{tpu_custom_call.1} parent=5 // pred_region
        %s411 = ssub.s32 %s30, 1
        // Predicated region
        $region13: #{tpu_custom_call.1} parent=11 // pred_check
          %p412 = pneg %p77
        $region14: #{tpu_custom_call.1} parent=11 // pred_check_branch
          %414 = sbr.rel (%p412) target = $region16
        $region15: #{tpu_custom_call.1} parent=11 // pred_region
          _
        $region16: #{tpu_custom_call.1} parent=11 // pred_fallthru
          _
        // Predicated region
        $region17: #{tpu_custom_call.1} parent=11 // pred_check
          %p415 = pneg %p98
        $region18: #{tpu_custom_call.1} parent=11 // pred_check_branch
          %417 = sbr.rel (%p415) target = $region20
        $region19: #{tpu_custom_call.1} parent=11 // pred_region
          _
        $region20: #{tpu_custom_call.1} parent=11 // pred_fallthru
          _
        // Predicated region
        $region21: #{tpu_custom_call.1} parent=11 // pred_check
          %p418 = pneg %p119
        $region22: #{tpu_custom_call.1} parent=11 // pred_check_branch
          %420 = sbr.rel (%p418) target = $region24
        $region23: #{tpu_custom_call.1} parent=11 // pred_region
          %s422 = ssub.s32 16, 16
          %423 = vsyncadd [#allocation3], %s422
          %s425 = sshll.u32 [#allocation2], 4
          %s426 = int_to_ptr.vmem [resolvable:$true] %s425
          %428 = dma.hbm_to_vmem [thread:$0]  %s3, 16, %s426, [#allocation3]
        $region24: #{tpu_custom_call.1} parent=11 // pred_fallthru
          _
        // Predicated region
        $region25: #{tpu_custom_call.1} parent=11 // pred_check
          %p429 = pneg %p140
        $region26: #{tpu_custom_call.1} parent=11 // pred_check_branch
          %431 = sbr.rel (%p429) target = $region28
        $region27: #{tpu_custom_call.1} parent=11 // pred_region
          %s433 = ssub.s32 16, 16
          %434 = vsyncadd [#allocation6], %s433
          %s436 = sshll.u32 [#allocation5], 4
          %s437 = int_to_ptr.vmem [resolvable:$true] %s436
          %439 = dma.hbm_to_vmem [thread:$0]  %s4, 16, %s437, [#allocation6]
        $region28: #{tpu_custom_call.1} parent=11 // pred_fallthru
          _
        // Predicated region
        $region29: #{tpu_custom_call.1} parent=11 // pred_check
          %p440 = pneg %p161
        $region30: #{tpu_custom_call.1} parent=11 // pred_check_branch
          %442 = sbr.rel (%p440) target = $region32
        $region31: #{tpu_custom_call.1} parent=11 // pred_region
          %s444 = ssub.s32 16, 16
          %445 = vsyncadd [#allocation6], %s444
          %s447 = sshll.u32 [#allocation7], 4
          %s448 = int_to_ptr.vmem [resolvable:$true] %s447
          %450 = dma.hbm_to_vmem [thread:$0]  %s5, 16, %s448, [#allocation6]
        $region32: #{tpu_custom_call.1} parent=11 // pred_fallthru
          _
        // Predicated region
        $region33: #{tpu_custom_call.1} parent=11 // pred_check
          %p451 = pneg %p182
        $region34: #{tpu_custom_call.1} parent=11 // pred_check_branch
          %453 = sbr.rel (%p451) target = $region36
        $region35: #{tpu_custom_call.1} parent=11 // pred_region
          %s455 = ssub.s32 16, 16
          %456 = vsyncadd [#allocation9], %s455
          %s458 = sshll.u32 [#allocation8], 4
          %s459 = int_to_ptr.vmem [resolvable:$true] %s458
          %461 = dma.hbm_to_vmem [thread:$0]  %s6, 16, %s459, [#allocation9]
        $region36: #{tpu_custom_call.1} parent=11 // pred_fallthru
          _
        // Predicated region
        $region37: #{tpu_custom_call.1} parent=11 // pred_check
          %p462 = pneg %p203
        $region38: #{tpu_custom_call.1} parent=11 // pred_check_branch
          %464 = sbr.rel (%p462) target = $region40
        $region39: #{tpu_custom_call.1} parent=11 // pred_region
          %s466 = ssub.s32 16, 16
          %467 = vsyncadd [#allocation9], %s466
          %s469 = sshll.u32 [#allocation10], 4
          %s470 = int_to_ptr.vmem [resolvable:$true] %s469
          %472 = dma.hbm_to_vmem [thread:$0]  %s7, 16, %s470, [#allocation9]
        $region40: #{tpu_custom_call.1} parent=11 // pred_fallthru
          _
        // Predicated region
        $region41: #{tpu_custom_call.1} parent=11 // pred_check
          %p473 = pneg %p224
        $region42: #{tpu_custom_call.1} parent=11 // pred_check_branch
          %475 = sbr.rel (%p473) target = $region44
        $region43: #{tpu_custom_call.1} parent=11 // pred_region
          %s477 = ssub.s32 16, 16
          %478 = vsyncadd [#allocation12], %s477
          %s480 = sshll.u32 [#allocation11], 4
          %s481 = int_to_ptr.vmem [resolvable:$true] %s480
          %483 = dma.hbm_to_vmem [thread:$0]  %s8, 16, %s481, [#allocation12]
        $region44: #{tpu_custom_call.1} parent=11 // pred_fallthru
          _
        // Predicated region
        $region45: #{tpu_custom_call.1} parent=11 // pred_check
          %p484 = pneg %p245
        $region46: #{tpu_custom_call.1} parent=11 // pred_check_branch
          %486 = sbr.rel (%p484) target = $region48
        $region47: #{tpu_custom_call.1} parent=11 // pred_region
          %s488 = ssub.s32 16, 16
          %489 = vsyncadd [#allocation12], %s488
          %s491 = sshll.u32 [#allocation13], 4
          %s492 = int_to_ptr.vmem [resolvable:$true] %s491
          %494 = dma.hbm_to_vmem [thread:$0]  %s9, 16, %s492, [#allocation12]
        $region48: #{tpu_custom_call.1} parent=11 // pred_fallthru
          _
        // Predicated region
        $region49: #{tpu_custom_call.1} parent=11 // pred_check
          %p495 = pneg %p266
        $region50: #{tpu_custom_call.1} parent=11 // pred_check_branch
          %497 = sbr.rel (%p495) target = $region52
        $region51: #{tpu_custom_call.1} parent=11 // pred_region
          _
        $region52: #{tpu_custom_call.1} parent=11 // pred_fallthru
          _
        // Predicated region
        $region53: #{tpu_custom_call.1} parent=11 // pred_check
          %p498 = pneg %p287
        $region54: #{tpu_custom_call.1} parent=11 // pred_check_branch
          %500 = sbr.rel (%p498) target = $region56
        $region55: #{tpu_custom_call.1} parent=11 // pred_region
          %s502 = ssub.s32 512, 512
          %503 = vsyncadd [#allocation15], %s502
          %s504 = sshll.u32 [#allocation14], 4
          %s505 = int_to_ptr.vmem [resolvable:$true] %s504
          %510 = dma.hbm_to_vmem [thread:$0]  %s11, 512, %s505, [#allocation15], 128, 128, 8
        $region56: #{tpu_custom_call.1} parent=11 // pred_fallthru
          _
        // Predicated region
        $region57: #{tpu_custom_call.1} parent=11 // pred_check
          %p511 = pneg %p308
        $region58: #{tpu_custom_call.1} parent=11 // pred_check_branch
          %513 = sbr.rel (%p511) target = $region60
        $region59: #{tpu_custom_call.1} parent=11 // pred_region
          _
        $region60: #{tpu_custom_call.1} parent=11 // pred_fallthru
          _
        // Predicated region
        $region61: #{tpu_custom_call.1} parent=11 // pred_check
          %p514 = pneg %p329
        $region62: #{tpu_custom_call.1} parent=11 // pred_check_branch
          %516 = sbr.rel (%p514) target = $region64
        $region63: #{tpu_custom_call.1} parent=11 // pred_region
          _
        $region64: #{tpu_custom_call.1} parent=11 // pred_fallthru
          _
        // Predicated region
        $region65: #{tpu_custom_call.1} parent=11 // pred_check
          %p517 = pneg %p350
        $region66: #{tpu_custom_call.1} parent=11 // pred_check_branch
          %519 = sbr.rel (%p517) target = $region68
        $region67: #{tpu_custom_call.1} parent=11 // pred_region
          %s521 = ssub.s32 1024, 1024
          %522 = vsyncadd [#allocation15], %s521
          %s523 = sshll.u32 [#allocation16], 4
          %s524 = int_to_ptr.vmem [resolvable:$true] %s523
          %529 = dma.hbm_to_vmem [thread:$0]  %s14, 1024, %s524, [#allocation15], 128, 128, 8
        $region68: #{tpu_custom_call.1} parent=11 // pred_fallthru
          _
        // Predicated region
        $region69: #{tpu_custom_call.1} parent=11 // pred_check
          %p530 = pneg %p371
        $region70: #{tpu_custom_call.1} parent=11 // pred_check_branch
          %532 = sbr.rel (%p530) target = $region72
        $region71: #{tpu_custom_call.1} parent=11 // pred_region
          _
        $region72: #{tpu_custom_call.1} parent=11 // pred_fallthru
          _
      $region12: #{tpu_custom_call.1} parent=5 // pred_fallthru
        _
      %p533 = scmp.lt.s32.totalorder %s30, 2
      // Predicated region
      $region73: #{tpu_custom_call.1} parent=5 // pred_check
        %p534 = pneg %p533
      $region74: #{tpu_custom_call.1} parent=5 // pred_check_branch
        %536 = sbr.rel (%p534) target = $region76
      $region75: #{tpu_custom_call.1} parent=5 // pred_region
        // Predicated region
        $region77: #{tpu_custom_call.1} parent=75 // pred_check
          %p537 = pneg %p50
        $region78: #{tpu_custom_call.1} parent=75 // pred_check_branch
          %539 = sbr.rel (%p537) target = $region80
        $region79: #{tpu_custom_call.1} parent=75 // pred_region
          %p540 = scmp.lt.s32.totalorder %s30, 1
          %s541 = scalar_select %p540, %s30, 1
          %s542 = smul.addr %s541, 8
          %s543 = scalar_lea.vmem %s0, %s542
        $region80: #{tpu_custom_call.1} parent=75 // pred_fallthru
          _
      $region76: #{tpu_custom_call.1} parent=5 // pred_fallthru
        _
      %p544 = scmp.le.s32.totalorder 1, %s30
      %p545 = scmp.lt.s32.totalorder %s30, 3
      %p546 = pnand %p544, %p545
      %p547 = pneg %p546
      // Predicated region
      $region81: #{tpu_custom_call.1} parent=5 // pred_check
        _
      $region82: #{tpu_custom_call.1} parent=5 // pred_check_branch
        %549 = sbr.rel (%p546) target = $region84
      $region83: #{tpu_custom_call.1} parent=5 // pred_region
        %s550 = ssub.s32 %s30, 1
        // Predicated region
        $region85: #{tpu_custom_call.1} parent=83 // pred_check
          %p551 = pneg %p119
        $region86: #{tpu_custom_call.1} parent=83 // pred_check_branch
          %553 = sbr.rel (%p551) target = $region88
        $region87: #{tpu_custom_call.1} parent=83 // pred_region
          %554 = dma.done [#allocation3], 16
        $region88: #{tpu_custom_call.1} parent=83 // pred_fallthru
          _
        // Predicated region
        $region89: #{tpu_custom_call.1} parent=83 // pred_check
          %p555 = pneg %p140
        $region90: #{tpu_custom_call.1} parent=83 // pred_check_branch
          %557 = sbr.rel (%p555) target = $region92
        $region91: #{tpu_custom_call.1} parent=83 // pred_region
          %558 = dma.done [#allocation6], 16
        $region92: #{tpu_custom_call.1} parent=83 // pred_fallthru
          _
        // Predicated region
        $region93: #{tpu_custom_call.1} parent=83 // pred_check
          %p559 = pneg %p161
        $region94: #{tpu_custom_call.1} parent=83 // pred_check_branch
          %561 = sbr.rel (%p559) target = $region96
        $region95: #{tpu_custom_call.1} parent=83 // pred_region
          %562 = dma.done [#allocation6], 16
        $region96: #{tpu_custom_call.1} parent=83 // pred_fallthru
          _
        // Predicated region
        $region97: #{tpu_custom_call.1} parent=83 // pred_check
          %p563 = pneg %p182
        $region98: #{tpu_custom_call.1} parent=83 // pred_check_branch
          %565 = sbr.rel (%p563) target = $region100
        $region99: #{tpu_custom_call.1} parent=83 // pred_region
          %566 = dma.done [#allocation9], 16
        $region100: #{tpu_custom_call.1} parent=83 // pred_fallthru
          _
        // Predicated region
        $region101: #{tpu_custom_call.1} parent=83 // pred_check
          %p567 = pneg %p203
        $region102: #{tpu_custom_call.1} parent=83 // pred_check_branch
          %569 = sbr.rel (%p567) target = $region104
        $region103: #{tpu_custom_call.1} parent=83 // pred_region
          %570 = dma.done [#allocation9], 16
        $region104: #{tpu_custom_call.1} parent=83 // pred_fallthru
          _
        // Predicated region
        $region105: #{tpu_custom_call.1} parent=83 // pred_check
          %p571 = pneg %p224
        $region106: #{tpu_custom_call.1} parent=83 // pred_check_branch
          %573 = sbr.rel (%p571) target = $region108
        $region107: #{tpu_custom_call.1} parent=83 // pred_region
          %574 = dma.done [#allocation12], 16
        $region108: #{tpu_custom_call.1} parent=83 // pred_fallthru
          _
        // Predicated region
        $region109: #{tpu_custom_call.1} parent=83 // pred_check
          %p575 = pneg %p245
        $region110: #{tpu_custom_call.1} parent=83 // pred_check_branch
          %577 = sbr.rel (%p575) target = $region112
        $region111: #{tpu_custom_call.1} parent=83 // pred_region
          %578 = dma.done [#allocation12], 16
        $region112: #{tpu_custom_call.1} parent=83 // pred_fallthru
          _
        // Predicated region
        $region113: #{tpu_custom_call.1} parent=83 // pred_check
          %p579 = pneg %p287
        $region114: #{tpu_custom_call.1} parent=83 // pred_check_branch
          %581 = sbr.rel (%p579) target = $region116
        $region115: #{tpu_custom_call.1} parent=83 // pred_region
          %582 = dma.done [#allocation15], 512
        $region116: #{tpu_custom_call.1} parent=83 // pred_fallthru
          _
        // Predicated region
        $region117: #{tpu_custom_call.1} parent=83 // pred_check
          %p583 = pneg %p350
        $region118: #{tpu_custom_call.1} parent=83 // pred_check_branch
          %585 = sbr.rel (%p583) target = $region120
        $region119: #{tpu_custom_call.1} parent=83 // pred_region
          %586 = dma.done [#allocation15], 1024
        $region120: #{tpu_custom_call.1} parent=83 // pred_fallthru
          _
        %p587 = scmp.lt.s32.totalorder %s35, 1
        %s588 = scalar_select %p587, %s35, 1
        %s589 = smul.addr %s588, 8
        %s590 = scalar_lea.vmem %s0, %s589
        %p591 = pneg %p56
        %p592 = pneg %p53
        %p593 = pneg %p77
        %p594 = pneg %p74
        %p595 = pneg %p98
        %p596 = pneg %p95
        %p597 = pneg %p119
        %p598 = pneg %p116
        %p599 = pneg %p140
        %p600 = pneg %p137
        %p601 = pneg %p161
        %p602 = pneg %p158
        %p603 = pneg %p182
        %p604 = pneg %p179
        %p605 = pneg %p203
        %p606 = pneg %p200
        %p607 = pneg %p224
        %p608 = pneg %p221
        %p609 = pneg %p245
        %p610 = pneg %p242
        %p611 = pneg %p266
        %p612 = pneg %p263
        %p613 = pneg %p287
        %p614 = pneg %p284
        %p615 = pneg %p308
        %p616 = pneg %p305
        %p617 = pneg %p329
        %p618 = pneg %p326
        %p619 = pneg %p350
        %p620 = pneg %p347
        %p621 = pneg %p371
        %p622 = pneg %p368
        %p623 = pneg %p397
        %p624 = pneg %p394
        %s625 = sand.u32 %s384, 1
        %s626 = scalar_lea.sflag [#allocation4], %s625
        %s627 = sand.u32 %s384, 1
        %s628 = smul.addr %s627, 8
        %s629 = scalar_lea.vmem [#allocation17], %s628
        %p630 = scmp.lt.s32.totalorder %s35, 1
        %s631 = scalar_select %p630, %s35, 1
        %s632 = smul.addr %s631, 8
        %s633 = scalar_lea.vmem %s0, %s632
        %v634 = vld [vmem:[%s633] sm:$0xff]
        %vm635 = vcmask 261120
        %v636 = vsel %vm635, %v634, 0.0
        %637 = vadd.xlane.f32.xlu0 %v636
        %v638 = vpop.xlane.xlu0 %637
        %v639 = vrcp.pop 32.0
        %v640 = vmul.f32 %v638, %v639
        %v641 = vsub.f32 %v634, %v640
        %v642 = vmul.f32 %v641, %v641
        %v643 = vsel %vm635, %v642, 0.0
        %644 = vadd.xlane.f32.xlu0 %v643
        %v645 = vpop.xlane.xlu0 %644
        %v646 = vmul.f32 %v645, %v639
        %v647 = vadd.f32 %v646, 1e-05
        %v648 = vrsqrt.pop %v647
        %v649 = vmul.f32 %v641, %v648
        %v650 = vld [vmem:[%s1] sm:$0x1]
        %v652 = vlaneseq
        %v653 = vshrl.u32 %v652, 7
        %v654 = vsub.s32 0, %v653
        %v655 = vrot.slane %v650, %v654
        %v657 = vmul.f32 %v649, %v655
        %v658 = vld [vmem:[%s2] sm:$0x1]
        %v660 = vlaneseq
        %v661 = vshrl.u32 %v660, 7
        %v662 = vsub.s32 0, %v661
        %v663 = vrot.slane %v658, %v662
        %v665 = vadd.f32 %v657, %v663
        %v666 = vrot.slane %v665, 7
        %v667 = vlaneseq
        %v668 = vshrl.u32 %v667, 7
        %vm669 = vcmp.eq.s32.totalorder %v668, 0
        %v670 = vsel %vm669, 0.0, %v666
        %v671 = vld [vmem:[#allocation7] sm:$0x1]
        %v672 = vld [vmem:[#allocation8] sm:$0x1]
        %v673 = vld [vmem:[#allocation10] sm:$0x1]
        %v675 = vlaneseq
        %v676 = vshrl.u32 %v675, 7
        %v677 = vsub.s32 0, %v676
        %v678 = vrot.slane %v671, %v677
        %v680 = vmul.f32 %v665, %v678
        %v681 = vsub.f32 1.0, %v671
        %v683 = vlaneseq
        %v684 = vshrl.u32 %v683, 7
        %v685 = vsub.s32 0, %v684
        %v686 = vrot.slane %v681, %v685
        %v688 = vmul.f32 %v670, %v686
        %v689 = vadd.f32 %v680, %v688
        %v691 = vlaneseq
        %v692 = vshrl.u32 %v691, 7
        %v693 = vsub.s32 0, %v692
        %v694 = vrot.slane %v672, %v693
        %v696 = vmul.f32 %v665, %v694
        %v697 = vsub.f32 1.0, %v672
        %v699 = vlaneseq
        %v700 = vshrl.u32 %v699, 7
        %v701 = vsub.s32 0, %v700
        %v702 = vrot.slane %v697, %v701
        %v704 = vmul.f32 %v670, %v702
        %v705 = vadd.f32 %v696, %v704
        %v707 = vlaneseq
        %v708 = vshrl.u32 %v707, 7
        %v709 = vsub.s32 0, %v708
        %v710 = vrot.slane %v673, %v709
        %v712 = vmul.f32 %v665, %v710
        %v713 = vsub.f32 1.0, %v673
        %v715 = vlaneseq
        %v716 = vshrl.u32 %v715, 7
        %v717 = vsub.s32 0, %v716
        %v718 = vrot.slane %v713, %v717
        %v720 = vmul.f32 %v670, %v718
        %v721 = vadd.f32 %v712, %v720
        %723 = vrot.lane.b32.xlu0 %v705, 32
        %v724 = vpop.permute.xlu0 %723
        %727 = vrot.lane.b32.xlu0 %v721, 64
        %v728 = vpop.permute.xlu0 %727
        %v730 = vsel %vm635, %v689, %v724
        %vm731 = vcmask 523264
        %v732 = vsel %vm731, %v730, %v728
        %v733 = vld [vmem:[%s10] sm:$0xff]
        %v734 = vld [vmem:[%s10 + $0x8] sm:$0xff]
        %v735 = vld [vmem:[%s10 + $0x10] sm:$0xff]
        %v736 = vld [vmem:[%s10 + $0x18] sm:$0xff]
        %v737 = vld [vmem:[%s10 + $0x20] sm:$0xff]
        %v738 = vld [vmem:[%s10 + $0x28] sm:$0xff]
        %v739 = vld [vmem:[%s10 + $0x30] sm:$0xff]
        %v740 = vld [vmem:[%s10 + $0x38] sm:$0xff]
        %v741 = vld [vmem:[%s10 + $0x40] sm:$0xff]
        %v742 = vld [vmem:[%s10 + $0x48] sm:$0xff]
        %v743 = vld [vmem:[%s10 + $0x50] sm:$0xff]
        %v744 = vld [vmem:[%s10 + $0x58] sm:$0xff]
        %vm745 = vcmask 785408
        %v747 = vsel %vm745, %v732, 0
        %749 = vmatprep.subr.mxu0 0.0
        %750 = vmatpush1.msra.mxu0 0.0
        %751 = vmatprep.subr.mxu0 0.0
        %752 = vmatpush1.msra.mxu0 0.0
        %753 = vmatprep.subr.mxu0 0.0
        %754 = vmatpush1.msra.mxu0 0.0
        %755 = vmatprep.subr.mxu0 0.0
        %756 = vmatpush1.msra.mxu0 0.0
        %757 = vmatprep.subr.mxu0 0.0
        %758 = vmatpush1.msra.mxu0 %v744
        %759 = vmatprep.subr.mxu0 0.0
        %760 = vmatpush1.msra.mxu0 %v743
        %761 = vmatprep.subr.mxu0 0.0
        %762 = vmatpush1.msra.mxu0 %v742
        %763 = vmatprep.subr.mxu0 0.0
        %764 = vmatpush1.msra.mxu0 %v741
        %765 = vmatprep.subr.mxu0 0.0
        %766 = vmatpush1.msra.mxu0 %v740
        %767 = vmatprep.subr.mxu0 0.0
        %768 = vmatpush1.msra.mxu0 %v739
        %769 = vmatprep.subr.mxu0 0.0
        %770 = vmatpush1.msra.mxu0 %v738
        %771 = vmatprep.subr.mxu0 0.0
        %772 = vmatpush1.msra.mxu0 %v737
        %773 = vmatprep.subr.mxu0 0.0
        %774 = vmatpush1.msra.mxu0 %v736
        %775 = vmatprep.subr.mxu0 0.0
        %776 = vmatpush1.msra.mxu0 %v735
        %777 = vmatprep.subr.mxu0 0.0
        %778 = vmatpush1.msra.mxu0 %v734
        %779 = vmatprep.subr.mxu0 0.0
        %780 = vmatpush1.msra.mxu0 %v733
        %781 = vmatprep.subr.mxu0 0.0
        %782 = vmatpush2.msra.mxu0 0.0
        %783 = vmatprep.subr.mxu0 0.0
        %784 = vmatpush2.msra.mxu0 0.0
        %785 = vmatprep.subr.mxu0 0.0
        %786 = vmatpush2.msra.mxu0 0.0
        %787 = vmatprep.subr.mxu0 0.0
        %788 = vmatpush2.msra.mxu0 0.0
        %789 = vmatprep.subr.mxu0 0.0
        %790 = vmatpush2.msra.mxu0 0.0
        %791 = vmatprep.subr.mxu0 0.0
        %792 = vmatpush2.msra.mxu0 0.0
        %793 = vmatprep.subr.mxu0 0.0
        %794 = vmatpush2.msra.mxu0 0.0
        %795 = vmatprep.subr.mxu0 0.0
        %796 = vmatpush2.msra.mxu0 0.0
        %797 = vmatprep.subr.mxu0 0.0
        %798 = vmatpush2.msra.mxu0 0.0
        %799 = vmatprep.subr.mxu0 0.0
        %800 = vmatpush2.msra.mxu0 0.0
        %801 = vmatprep.subr.mxu0 0.0
        %802 = vmatpush2.msra.mxu0 0.0
        %803 = vmatprep.subr.mxu0 0.0
        %804 = vmatpush2.msra.mxu0 0.0
        %805 = vmatprep.subr.mxu0 0.0
        %806 = vmatpush2.msra.mxu0 0.0
        %807 = vmatprep.subr.mxu0 0.0
        %808 = vmatpush2.msra.mxu0 0.0
        %809 = vmatprep.subr.mxu0 0.0
        %810 = vmatpush2.msra.mxu0 0.0
        %811 = vmatprep.subr.mxu0 0.0
        %812 = vmatpush2.msra.mxu0 0.0
        %813 = vmatprep.mubr.f32.mxu0 0.0
        %814 = vmatmul.mubr.f32.gmra.mxu0 %v747
        %v815 = vpop.f32.mrf.mxu0
        %v816 = vadd.f32 0.0, %v815
        %v817 = vpop.f32.mrf.mxu0
        %818 = vdwg.mxu0
        %v819 = vxor.u32 %v816, 2147483648
        %v820 = vmul.f32 %v819, 1.442695
        %v821 = vpow.pop %v820
        %v822 = vadd.f32 %v821, 1.0
        %v823 = vrcp.pop %v822
        %v824 = vmul.f32 1.0, %v823
        %v825 = vld [vmem:[#allocation11] sm:$0x1]
        %v826 = vmul.f32 %v825, 1.442695
        %v827 = vpow.pop %v826
        %v828 = vsub.f32 0.0, %v827
        %v829 = vld [vmem:[#allocation13] sm:$0x1]
        %v830 = vadd.f32 %v829, %v816
        %v831 = vmax.f32 %v830, -1e+38
        %v832 = vsub.f32 -1e+38, %v831
        %v833 = vmul.f32 %v832, 1.442695
        %v834 = vpow.pop %v833
        %v835 = vsub.f32 %v830, %v831
        %v836 = vmul.f32 %v835, 1.442695
        %v837 = vpow.pop %v836
        %v838 = vmul.f32 %v834, 0.0
        %v841 = vunpack.c.l.s4 1966171168
        %v842 = vunpack.c.0.s8 %v841
        %v843 = vlaneseq
        %v844 = vshrl.u32 %v843, 7
        %v845 = vsub.s32 %v842, %v844
        %v846 = vrot.slane %v816, %v845
        %v848 = vunpack.c.l.s4 1966171168
        %v849 = vunpack.c.0.s8 %v848
        %v850 = vlaneseq
        %v851 = vshrl.u32 %v850, 7
        %v852 = vsub.s32 %v849, %v851
        %v853 = vrot.slane %v846, %v852
        %854 = vrot.lane.b32.xlu0 %v853, 96
        %v855 = vpop.permute.xlu0 %854
        %v857 = vmul.f32 %v837, %v855
        %v858 = vadd.f32 %v838, %v857
        %v859 = vadd.f32 %v838, %v837
        %v860 = vrcp.pop %v859
        %v861 = vmul.f32 %v858, %v860
        %v862 = vadd.f32 %v828, -1e+38
        %v863 = vmax.f32 %v862, %v816
        %v864 = vsub.f32 %v862, %v863
        %v865 = vmul.f32 %v864, 1.442695
        %v866 = vpow.pop %v865
        %v867 = vsub.f32 %v816, %v863
        %v868 = vmul.f32 %v867, 1.442695
        %v869 = vpow.pop %v868
        %v870 = vmul.f32 %v866, 0.0
        %871 = vrot.lane.b32.xlu0 %v816, 96
        %v872 = vpop.permute.xlu0 %871
        %v874 = vmul.f32 %v869, %v872
        %v875 = vadd.f32 %v870, %v874
        %v876 = vadd.f32 %v870, %v869
        %v877 = vcombine.high %v846, %v846
        %v879 = vunpack.c.l.s4 1966171168
        %v880 = vunpack.c.0.s8 %v879
        %v881 = vlaneseq
        %v882 = vshrl.u32 %v881, 7
        %v883 = vsub.s32 %v880, %v882
        %v884 = vrot.slane %v877, %v883
        %v886 = vadd.f32 %v829, %v884
        %v887 = vmax.f32 %v863, %v886
        %v888 = vsub.f32 %v863, %v887
        %v889 = vmul.f32 %v888, 1.442695
        %v890 = vpow.pop %v889
        %v891 = vsub.f32 %v886, %v887
        %v892 = vmul.f32 %v891, 1.442695
        %v893 = vpow.pop %v892
        %v894 = vmul.f32 %v890, %v875
        %895 = vrot.lane.b32.xlu0 %v884, 96
        %v896 = vpop.permute.xlu0 %895
        %v898 = vmul.f32 %v893, %v896
        %v899 = vadd.f32 %v894, %v898
        %v900 = vmul.f32 %v890, %v876
        %v901 = vadd.f32 %v900, %v893
        %v902 = vrcp.pop %v901
        %v903 = vmul.f32 %v899, %v902
        %v904 = vadd.f32 %v828, %v863
        %v905 = vmax.f32 %v904, %v884
        %v906 = vsub.f32 %v904, %v905
        %v907 = vmul.f32 %v906, 1.442695
        %v908 = vpow.pop %v907
        %v910 = vlaneseq
        %v911 = vshrl.u32 %v910, 7
        %v912 = vsub.s32 0, %v911
        %v913 = vrot.slane %v905, %v912
        %v915 = vsub.f32 %v816, %v913
        %v916 = vmul.f32 %v915, 1.442695
        %v917 = vpow.pop %v916
        %v918 = vmul.f32 %v908, %v875
        %v919 = vmul.f32 %v917, %v872
        %v922 = vunpack.c.l.s4 1966171168
        %v923 = vunpack.c.0.s8 %v922
        %v924 = vlaneseq
        %v925 = vshrl.u32 %v924, 7
        %v926 = vsub.s32 %v923, %v925
        %v927 = vrot.slane %v919, %v926
        %v928 = vcombine.high %v927, %v927
        %v930 = vunpack.c.l.s4 1966171168
        %v931 = vunpack.c.0.s8 %v930
        %v932 = vlaneseq
        %v933 = vshrl.u32 %v932, 7
        %v934 = vsub.s32 %v931, %v933
        %v935 = vrot.slane %v928, %v934
        %v937 = vadd.f32 %v918, %v935
        %v938 = vmul.f32 %v908, %v876
        %v941 = vunpack.c.l.s4 1966171168
        %v942 = vunpack.c.0.s8 %v941
        %v943 = vlaneseq
        %v944 = vshrl.u32 %v943, 7
        %v945 = vsub.s32 %v942, %v944
        %v946 = vrot.slane %v917, %v945
        %v947 = vcombine.high %v946, %v946
        %v949 = vunpack.c.l.s4 1966171168
        %v950 = vunpack.c.0.s8 %v949
        %v951 = vlaneseq
        %v952 = vshrl.u32 %v951, 7
        %v953 = vsub.s32 %v950, %v952
        %v954 = vrot.slane %v947, %v953
        %v956 = vadd.f32 %v938, %v954
        %v957 = vcombine.high %v853, %v853
        %v959 = vadd.f32 %v829, %v957
        %v960 = vmax.f32 %v905, %v959
        %v961 = vsub.f32 %v905, %v960
        %v962 = vmul.f32 %v961, 1.442695
        %v963 = vpow.pop %v962
        %v964 = vsub.f32 %v959, %v960
        %v965 = vmul.f32 %v964, 1.442695
        %v966 = vpow.pop %v965
        %v967 = vmul.f32 %v963, %v937
        %968 = vrot.lane.b32.xlu0 %v957, 96
        %v969 = vpop.permute.xlu0 %968
        %v971 = vmul.f32 %v966, %v969
        %v972 = vadd.f32 %v967, %v971
        %v973 = vmul.f32 %v963, %v956
        %v974 = vadd.f32 %v973, %v966
        %v975 = vrcp.pop %v974
        %v976 = vmul.f32 %v972, %v975
        %v977 = vadd.f32 %v828, %v905
        %v978 = vmax.f32 %v977, %v957
        %v979 = vsub.f32 %v977, %v978
        %v980 = vmul.f32 %v979, 1.442695
        %v981 = vpow.pop %v980
        %v983 = vlaneseq
        %v984 = vshrl.u32 %v983, 7
        %v985 = vsub.s32 0, %v984
        %v986 = vrot.slane %v978, %v985
        %v988 = vsub.f32 %v816, %v986
        %v989 = vmul.f32 %v988, 1.442695
        %v990 = vpow.pop %v989
        %v991 = vmul.f32 %v981, %v937
        %v992 = vmul.f32 %v990, %v872
        %v995 = vunpack.c.l.s4 1966171168
        %v996 = vunpack.c.0.s8 %v995
        %v997 = vlaneseq
        %v998 = vshrl.u32 %v997, 7
        %v999 = vsub.s32 %v996, %v998
        %v1000 = vrot.slane %v992, %v999
        %v1002 = vunpack.c.l.s4 1966171168
        %v1003 = vunpack.c.0.s8 %v1002
        %v1004 = vlaneseq
        %v1005 = vshrl.u32 %v1004, 7
        %v1006 = vsub.s32 %v1003, %v1005
        %v1007 = vrot.slane %v1000, %v1006
        %v1008 = vcombine.high %v1007, %v1007
        %v1010 = vadd.f32 %v991, %v1008
        %v1011 = vmul.f32 %v981, %v956
        %v1014 = vunpack.c.l.s4 1966171168
        %v1015 = vunpack.c.0.s8 %v1014
        %v1016 = vlaneseq
        %v1017 = vshrl.u32 %v1016, 7
        %v1018 = vsub.s32 %v1015, %v1017
        %v1019 = vrot.slane %v990, %v1018
        %v1021 = vunpack.c.l.s4 1966171168
        %v1022 = vunpack.c.0.s8 %v1021
        %v1023 = vlaneseq
        %v1024 = vshrl.u32 %v1023, 7
        %v1025 = vsub.s32 %v1022, %v1024
        %v1026 = vrot.slane %v1019, %v1025
        %v1027 = vcombine.high %v1026, %v1026
        %v1029 = vadd.f32 %v1011, %v1027
        %v1030 = vcombine.high %v884, %v884
        %v1032 = vadd.f32 %v829, %v1030
        %v1033 = vmax.f32 %v978, %v1032
        %v1034 = vsub.f32 %v978, %v1033
        %v1035 = vmul.f32 %v1034, 1.442695
        %v1036 = vpow.pop %v1035
        %v1037 = vsub.f32 %v1032, %v1033
        %v1038 = vmul.f32 %v1037, 1.442695
        %v1039 = vpow.pop %v1038
        %v1040 = vmul.f32 %v1036, %v1010
        %1041 = vrot.lane.b32.xlu0 %v1030, 96
        %v1042 = vpop.permute.xlu0 %1041
        %v1044 = vmul.f32 %v1039, %v1042
        %v1045 = vadd.f32 %v1040, %v1044
        %v1046 = vmul.f32 %v1036, %v1029
        %v1047 = vadd.f32 %v1046, %v1039
        %v1048 = vrcp.pop %v1047
        %v1049 = vmul.f32 %v1045, %v1048
        %v1050 = vadd.f32 %v828, %v978
        %v1051 = vmax.f32 %v1050, %v1030
        %v1052 = vsub.f32 %v1050, %v1051
        %v1053 = vmul.f32 %v1052, 1.442695
        %v1054 = vpow.pop %v1053
        %v1056 = vlaneseq
        %v1057 = vshrl.u32 %v1056, 7
        %v1058 = vsub.s32 0, %v1057
        %v1059 = vrot.slane %v1051, %v1058
        %v1061 = vsub.f32 %v816, %v1059
        %v1062 = vmul.f32 %v1061, 1.442695
        %v1063 = vpow.pop %v1062
        %v1064 = vmul.f32 %v1054, %v1010
        %v1065 = vmul.f32 %v1063, %v872
        %v1068 = vunpack.c.l.s4 1966171168
        %v1069 = vunpack.c.0.s8 %v1068
        %v1070 = vlaneseq
        %v1071 = vshrl.u32 %v1070, 7
        %v1072 = vsub.s32 %v1069, %v1071
        %v1073 = vrot.slane %v1065, %v1072
        %v1074 = vcombine.high %v1073, %v1073
        %v1076 = vunpack.c.l.s4 1966171168
        %v1077 = vunpack.c.0.s8 %v1076
        %v1078 = vlaneseq
        %v1079 = vshrl.u32 %v1078, 7
        %v1080 = vsub.s32 %v1077, %v1079
        %v1081 = vrot.slane %v1074, %v1080
        %v1082 = vcombine.high %v1081, %v1081
        %v1084 = vadd.f32 %v1064, %v1082
        %v1085 = vmul.f32 %v1054, %v1029
        %v1088 = vunpack.c.l.s4 1966171168
        %v1089 = vunpack.c.0.s8 %v1088
        %v1090 = vlaneseq
        %v1091 = vshrl.u32 %v1090, 7
        %v1092 = vsub.s32 %v1089, %v1091
        %v1093 = vrot.slane %v1063, %v1092
        %v1094 = vcombine.high %v1093, %v1093
        %v1096 = vunpack.c.l.s4 1966171168
        %v1097 = vunpack.c.0.s8 %v1096
        %v1098 = vlaneseq
        %v1099 = vshrl.u32 %v1098, 7
        %v1100 = vsub.s32 %v1097, %v1099
        %v1101 = vrot.slane %v1094, %v1100
        %v1102 = vcombine.high %v1101, %v1101
        %v1104 = vadd.f32 %v1085, %v1102
        %v1105 = vcombine.high %v816, %v816
        %v1107 = vunpack.c.l.s4 1966171168
        %v1108 = vunpack.c.0.s8 %v1107
        %v1109 = vlaneseq
        %v1110 = vshrl.u32 %v1109, 7
        %v1111 = vsub.s32 %v1108, %v1110
        %v1112 = vrot.slane %v1105, %v1111
        %v1114 = vunpack.c.l.s4 1966171168
        %v1115 = vunpack.c.0.s8 %v1114
        %v1116 = vlaneseq
        %v1117 = vshrl.u32 %v1116, 7
        %v1118 = vsub.s32 %v1115, %v1117
        %v1119 = vrot.slane %v1112, %v1118
        %v1121 = vadd.f32 %v829, %v1119
        %v1122 = vmax.f32 %v1051, %v1121
        %v1123 = vsub.f32 %v1051, %v1122
        %v1124 = vmul.f32 %v1123, 1.442695
        %v1125 = vpow.pop %v1124
        %v1126 = vsub.f32 %v1121, %v1122
        %v1127 = vmul.f32 %v1126, 1.442695
        %v1128 = vpow.pop %v1127
        %v1129 = vmul.f32 %v1125, %v1084
        %1130 = vrot.lane.b32.xlu0 %v1119, 96
        %v1131 = vpop.permute.xlu0 %1130
        %v1133 = vmul.f32 %v1128, %v1131
        %v1134 = vadd.f32 %v1129, %v1133
        %v1135 = vmul.f32 %v1125, %v1104
        %v1136 = vadd.f32 %v1135, %v1128
        %v1137 = vrcp.pop %v1136
        %v1138 = vmul.f32 %v1134, %v1137
        %v1139 = vadd.f32 %v828, %v1051
        %v1140 = vmax.f32 %v1139, %v1119
        %v1141 = vsub.f32 %v1139, %v1140
        %v1142 = vmul.f32 %v1141, 1.442695
        %v1143 = vpow.pop %v1142
        %v1145 = vlaneseq
        %v1146 = vshrl.u32 %v1145, 7
        %v1147 = vsub.s32 0, %v1146
        %v1148 = vrot.slane %v1140, %v1147
        %v1150 = vsub.f32 %v816, %v1148
        %v1151 = vmul.f32 %v1150, 1.442695
        %v1152 = vpow.pop %v1151
        %v1153 = vmul.f32 %v1143, %v1084
        %v1154 = vmul.f32 %v1152, %v872
        %v1156 = vcombine.high %v1154, %v1154
        %v1158 = vunpack.c.l.s4 1966171168
        %v1159 = vunpack.c.0.s8 %v1158
        %v1160 = vlaneseq
        %v1161 = vshrl.u32 %v1160, 7
        %v1162 = vsub.s32 %v1159, %v1161
        %v1163 = vrot.slane %v1156, %v1162
        %v1165 = vunpack.c.l.s4 1966171168
        %v1166 = vunpack.c.0.s8 %v1165
        %v1167 = vlaneseq
        %v1168 = vshrl.u32 %v1167, 7
        %v1169 = vsub.s32 %v1166, %v1168
        %v1170 = vrot.slane %v1163, %v1169
        %v1172 = vadd.f32 %v1153, %v1170
        %v1173 = vmul.f32 %v1143, %v1104
        %v1175 = vcombine.high %v1152, %v1152
        %v1177 = vunpack.c.l.s4 1966171168
        %v1178 = vunpack.c.0.s8 %v1177
        %v1179 = vlaneseq
        %v1180 = vshrl.u32 %v1179, 7
        %v1181 = vsub.s32 %v1178, %v1180
        %v1182 = vrot.slane %v1175, %v1181
        %v1184 = vunpack.c.l.s4 1966171168
        %v1185 = vunpack.c.0.s8 %v1184
        %v1186 = vlaneseq
        %v1187 = vshrl.u32 %v1186, 7
        %v1188 = vsub.s32 %v1185, %v1187
        %v1189 = vrot.slane %v1182, %v1188
        %v1191 = vadd.f32 %v1173, %v1189
        %v1192 = vcombine.high %v1112, %v1112
        %v1194 = vunpack.c.l.s4 1966171168
        %v1195 = vunpack.c.0.s8 %v1194
        %v1196 = vlaneseq
        %v1197 = vshrl.u32 %v1196, 7
        %v1198 = vsub.s32 %v1195, %v1197
        %v1199 = vrot.slane %v1192, %v1198
        %v1201 = vadd.f32 %v829, %v1199
        %v1202 = vmax.f32 %v1140, %v1201
        %v1203 = vsub.f32 %v1140, %v1202
        %v1204 = vmul.f32 %v1203, 1.442695
        %v1205 = vpow.pop %v1204
        %v1206 = vsub.f32 %v1201, %v1202
        %v1207 = vmul.f32 %v1206, 1.442695
        %v1208 = vpow.pop %v1207
        %v1209 = vmul.f32 %v1205, %v1172
        %1210 = vrot.lane.b32.xlu0 %v1199, 96
        %v1211 = vpop.permute.xlu0 %1210
        %v1213 = vmul.f32 %v1208, %v1211
        %v1214 = vadd.f32 %v1209, %v1213
        %v1215 = vmul.f32 %v1205, %v1191
        %v1216 = vadd.f32 %v1215, %v1208
        %v1217 = vrcp.pop %v1216
        %v1218 = vmul.f32 %v1214, %v1217
        %v1219 = vadd.f32 %v828, %v1140
        %v1220 = vmax.f32 %v1219, %v1199
        %v1221 = vsub.f32 %v1219, %v1220
        %v1222 = vmul.f32 %v1221, 1.442695
        %v1223 = vpow.pop %v1222
        %v1225 = vlaneseq
        %v1226 = vshrl.u32 %v1225, 7
        %v1227 = vsub.s32 0, %v1226
        %v1228 = vrot.slane %v1220, %v1227
        %v1230 = vsub.f32 %v816, %v1228
        %v1231 = vmul.f32 %v1230, 1.442695
        %v1232 = vpow.pop %v1231
        %v1233 = vmul.f32 %v1223, %v1172
        %v1234 = vmul.f32 %v1232, %v872
        %v1236 = vcombine.high %v1234, %v1234
        %v1238 = vunpack.c.l.s4 1966171168
        %v1239 = vunpack.c.0.s8 %v1238
        %v1240 = vlaneseq
        %v1241 = vshrl.u32 %v1240, 7
        %v1242 = vsub.s32 %v1239, %v1241
        %v1243 = vrot.slane %v1236, %v1242
        %v1244 = vcombine.high %v1243, %v1243
        %v1246 = vunpack.c.l.s4 1966171168
        %v1247 = vunpack.c.0.s8 %v1246
        %v1248 = vlaneseq
        %v1249 = vshrl.u32 %v1248, 7
        %v1250 = vsub.s32 %v1247, %v1249
        %v1251 = vrot.slane %v1244, %v1250
        %v1253 = vadd.f32 %v1233, %v1251
        %v1254 = vmul.f32 %v1223, %v1191
        %v1256 = vcombine.high %v1232, %v1232
        %v1258 = vunpack.c.l.s4 1966171168
        %v1259 = vunpack.c.0.s8 %v1258
        %v1260 = vlaneseq
        %v1261 = vshrl.u32 %v1260, 7
        %v1262 = vsub.s32 %v1259, %v1261
        %v1263 = vrot.slane %v1256, %v1262
        %v1264 = vcombine.high %v1263, %v1263
        %v1266 = vunpack.c.l.s4 1966171168
        %v1267 = vunpack.c.0.s8 %v1266
        %v1268 = vlaneseq
        %v1269 = vshrl.u32 %v1268, 7
        %v1270 = vsub.s32 %v1267, %v1269
        %v1271 = vrot.slane %v1264, %v1270
        %v1273 = vadd.f32 %v1254, %v1271
        %v1274 = vcombine.high %v1119, %v1119
        %v1276 = vadd.f32 %v829, %v1274
        %v1277 = vmax.f32 %v1220, %v1276
        %v1278 = vsub.f32 %v1220, %v1277
        %v1279 = vmul.f32 %v1278, 1.442695
        %v1280 = vpow.pop %v1279
        %v1281 = vsub.f32 %v1276, %v1277
        %v1282 = vmul.f32 %v1281, 1.442695
        %v1283 = vpow.pop %v1282
        %v1284 = vmul.f32 %v1280, %v1253
        %1285 = vrot.lane.b32.xlu0 %v1274, 96
        %v1286 = vpop.permute.xlu0 %1285
        %v1288 = vmul.f32 %v1283, %v1286
        %v1289 = vadd.f32 %v1284, %v1288
        %v1290 = vmul.f32 %v1280, %v1273
        %v1291 = vadd.f32 %v1290, %v1283
        %v1292 = vrcp.pop %v1291
        %v1293 = vmul.f32 %v1289, %v1292
        %v1294 = vadd.f32 %v828, %v1220
        %v1295 = vmax.f32 %v1294, %v1274
        %v1296 = vsub.f32 %v1294, %v1295
        %v1297 = vmul.f32 %v1296, 1.442695
        %v1298 = vpow.pop %v1297
        %v1300 = vlaneseq
        %v1301 = vshrl.u32 %v1300, 7
        %v1302 = vsub.s32 0, %v1301
        %v1303 = vrot.slane %v1295, %v1302
        %v1305 = vsub.f32 %v816, %v1303
        %v1306 = vmul.f32 %v1305, 1.442695
        %v1307 = vpow.pop %v1306
        %v1308 = vmul.f32 %v1298, %v1253
        %v1309 = vmul.f32 %v1307, %v872
        %v1311 = vcombine.high %v1309, %v1309
        %v1313 = vunpack.c.l.s4 1966171168
        %v1314 = vunpack.c.0.s8 %v1313
        %v1315 = vlaneseq
        %v1316 = vshrl.u32 %v1315, 7
        %v1317 = vsub.s32 %v1314, %v1316
        %v1318 = vrot.slane %v1311, %v1317
        %v1320 = vunpack.c.l.s4 1966171168
        %v1321 = vunpack.c.0.s8 %v1320
        %v1322 = vlaneseq
        %v1323 = vshrl.u32 %v1322, 7
        %v1324 = vsub.s32 %v1321, %v1323
        %v1325 = vrot.slane %v1318, %v1324
        %v1326 = vcombine.high %v1325, %v1325
        %v1328 = vadd.f32 %v1308, %v1326
        %v1329 = vmul.f32 %v1298, %v1273
        %v1331 = vcombine.high %v1307, %v1307
        %v1333 = vunpack.c.l.s4 1966171168
        %v1334 = vunpack.c.0.s8 %v1333
        %v1335 = vlaneseq
        %v1336 = vshrl.u32 %v1335, 7
        %v1337 = vsub.s32 %v1334, %v1336
        %v1338 = vrot.slane %v1331, %v1337
        %v1340 = vunpack.c.l.s4 1966171168
        %v1341 = vunpack.c.0.s8 %v1340
        %v1342 = vlaneseq
        %v1343 = vshrl.u32 %v1342, 7
        %v1344 = vsub.s32 %v1341, %v1343
        %v1345 = vrot.slane %v1338, %v1344
        %v1346 = vcombine.high %v1345, %v1345
        %v1348 = vadd.f32 %v1329, %v1346
        %v1349 = vcombine.high %v1199, %v1199
        %v1351 = vadd.f32 %v829, %v1349
        %v1352 = vmax.f32 %v1295, %v1351
        %v1353 = vsub.f32 %v1295, %v1352
        %v1354 = vmul.f32 %v1353, 1.442695
        %v1355 = vpow.pop %v1354
        %v1356 = vsub.f32 %v1351, %v1352
        %v1357 = vmul.f32 %v1356, 1.442695
        %v1358 = vpow.pop %v1357
        %v1359 = vmul.f32 %v1355, %v1328
        %1360 = vrot.lane.b32.xlu0 %v1349, 96
        %v1361 = vpop.permute.xlu0 %1360
        %v1363 = vmul.f32 %v1358, %v1361
        %v1364 = vadd.f32 %v1359, %v1363
        %v1365 = vmul.f32 %v1355, %v1348
        %v1366 = vadd.f32 %v1365, %v1358
        %v1367 = vrcp.pop %v1366
        %v1368 = vmul.f32 %v1364, %v1367
        %v1370 = vlaneseq
        %v1371 = vshrl.u32 %v1370, 7
        %v1372 = vsub.s32 0, %v1371
        %v1373 = vrot.slane %v903, %v1372
        %v1376 = vlaneseq
        %v1377 = vshrl.u32 %v1376, 7
        %v1378 = vsub.s32 0, %v1377
        %v1379 = vrot.slane %v976, %v1378
        %v1382 = vlaneseq
        %v1383 = vshrl.u32 %v1382, 7
        %v1384 = vsub.s32 0, %v1383
        %v1385 = vrot.slane %v1049, %v1384
        %v1388 = vlaneseq
        %v1389 = vshrl.u32 %v1388, 7
        %v1390 = vsub.s32 0, %v1389
        %v1391 = vrot.slane %v1138, %v1390
        %v1394 = vlaneseq
        %v1395 = vshrl.u32 %v1394, 7
        %v1396 = vsub.s32 0, %v1395
        %v1397 = vrot.slane %v1218, %v1396
        %v1400 = vlaneseq
        %v1401 = vshrl.u32 %v1400, 7
        %v1402 = vsub.s32 0, %v1401
        %v1403 = vrot.slane %v1293, %v1402
        %v1406 = vlaneseq
        %v1407 = vshrl.u32 %v1406, 7
        %v1408 = vsub.s32 0, %v1407
        %v1409 = vrot.slane %v1368, %v1408
        %vm1411 = vcmask 1040384
        %v1412 = vsel %vm1411, %v861, %v1373
        %vm1413 = vcmask 1041408
        %v1414 = vsel %vm1413, %v1412, %v1379
        %vm1415 = vcmask 1042432
        %v1416 = vsel %vm1415, %v1414, %v1385
        %vm1417 = vcmask 1043456
        %v1418 = vsel %vm1417, %v1416, %v1391
        %vm1419 = vcmask 1044480
        %v1420 = vsel %vm1419, %v1418, %v1397
        %vm1421 = vcmask 1045504
        %v1422 = vsel %vm1421, %v1420, %v1403
        %vm1423 = vcmask 1046528
        %v1424 = vsel %vm1423, %v1422, %v1409
        %1426 = vrot.lane.b32.xlu0 %v1424, 64
        %v1427 = vpop.permute.xlu0 %1426
        %v1429 = vmul.f32 %v824, %v1427
        %v1430 = vld [vmem:[#allocation14] sm:$0xff]
        %v1431 = vld [vmem:[#allocation14 + $0x8] sm:$0xff]
        %v1432 = vld [vmem:[#allocation14 + $0x10] sm:$0xff]
        %v1433 = vld [vmem:[#allocation14 + $0x18] sm:$0xff]
        %1435 = vrot.lane.b32.xlu0 %v1429, 64
        %v1436 = vpop.permute.xlu0 %1435
        %v1437 = vsel %vm635, %v1436, 0
        %1439 = vmatprep.subr.mxu0 0.0
        %1440 = vmatpush1.msra.mxu0 0.0
        %1441 = vmatprep.subr.mxu0 0.0
        %1442 = vmatpush1.msra.mxu0 0.0
        %1443 = vmatprep.subr.mxu0 0.0
        %1444 = vmatpush1.msra.mxu0 0.0
        %1445 = vmatprep.subr.mxu0 0.0
        %1446 = vmatpush1.msra.mxu0 0.0
        %1447 = vmatprep.subr.mxu0 0.0
        %1448 = vmatpush1.msra.mxu0 0.0
        %1449 = vmatprep.subr.mxu0 0.0
        %1450 = vmatpush1.msra.mxu0 0.0
        %1451 = vmatprep.subr.mxu0 0.0
        %1452 = vmatpush1.msra.mxu0 0.0
        %1453 = vmatprep.subr.mxu0 0.0
        %1454 = vmatpush1.msra.mxu0 0.0
        %1455 = vmatprep.subr.mxu0 0.0
        %1456 = vmatpush1.msra.mxu0 0.0
        %1457 = vmatprep.subr.mxu0 0.0
        %1458 = vmatpush1.msra.mxu0 0.0
        %1459 = vmatprep.subr.mxu0 0.0
        %1460 = vmatpush1.msra.mxu0 0.0
        %1461 = vmatprep.subr.mxu0 0.0
        %1462 = vmatpush1.msra.mxu0 0.0
        %1463 = vmatprep.subr.mxu0 0.0
        %1464 = vmatpush1.msra.mxu0 %v1433
        %1465 = vmatprep.subr.mxu0 0.0
        %1466 = vmatpush1.msra.mxu0 %v1432
        %1467 = vmatprep.subr.mxu0 0.0
        %1468 = vmatpush1.msra.mxu0 %v1431
        %1469 = vmatprep.subr.mxu0 0.0
        %1470 = vmatpush1.msra.mxu0 %v1430
        %1471 = vmatprep.subr.mxu0 0.0
        %1472 = vmatpush2.msra.mxu0 0.0
        %1473 = vmatprep.subr.mxu0 0.0
        %1474 = vmatpush2.msra.mxu0 0.0
        %1475 = vmatprep.subr.mxu0 0.0
        %1476 = vmatpush2.msra.mxu0 0.0
        %1477 = vmatprep.subr.mxu0 0.0
        %1478 = vmatpush2.msra.mxu0 0.0
        %1479 = vmatprep.subr.mxu0 0.0
        %1480 = vmatpush2.msra.mxu0 0.0
        %1481 = vmatprep.subr.mxu0 0.0
        %1482 = vmatpush2.msra.mxu0 0.0
        %1483 = vmatprep.subr.mxu0 0.0
        %1484 = vmatpush2.msra.mxu0 0.0
        %1485 = vmatprep.subr.mxu0 0.0
        %1486 = vmatpush2.msra.mxu0 0.0
        %1487 = vmatprep.subr.mxu0 0.0
        %1488 = vmatpush2.msra.mxu0 0.0
        %1489 = vmatprep.subr.mxu0 0.0
        %1490 = vmatpush2.msra.mxu0 0.0
        %1491 = vmatprep.subr.mxu0 0.0
        %1492 = vmatpush2.msra.mxu0 0.0
        %1493 = vmatprep.subr.mxu0 0.0
        %1494 = vmatpush2.msra.mxu0 0.0
        %1495 = vmatprep.subr.mxu0 0.0
        %1496 = vmatpush2.msra.mxu0 0.0
        %1497 = vmatprep.subr.mxu0 0.0
        %1498 = vmatpush2.msra.mxu0 0.0
        %1499 = vmatprep.subr.mxu0 0.0
        %1500 = vmatpush2.msra.mxu0 0.0
        %1501 = vmatprep.subr.mxu0 0.0
        %1502 = vmatpush2.msra.mxu0 0.0
        %1503 = vmatprep.mubr.f32.mxu0 0.0
        %1504 = vmatmul.mubr.f32.gmra.mxu0 %v1437
        %v1505 = vpop.f32.mrf.mxu0
        %v1506 = vadd.f32 0.0, %v1505
        %v1507 = vpop.f32.mrf.mxu0
        %1508 = vdwg.mxu0
        %v1509 = vadd.f32 %v634, %v1506
        %v1510 = vsel %vm635, %v1509, 0.0
        %1511 = vadd.xlane.f32.xlu0 %v1510
        %v1512 = vpop.xlane.xlu0 %1511
        %v1513 = vmul.f32 %v1512, %v639
        %v1514 = vsub.f32 %v1509, %v1513
        %v1515 = vmul.f32 %v1514, %v1514
        %v1516 = vsel %vm635, %v1515, 0.0
        %1517 = vadd.xlane.f32.xlu0 %v1516
        %v1518 = vpop.xlane.xlu0 %1517
        %v1519 = vmul.f32 %v1518, %v639
        %v1520 = vadd.f32 %v1519, 1e-05
        %v1521 = vrsqrt.pop %v1520
        %v1522 = vmul.f32 %v1514, %v1521
        %v1523 = vld [vmem:[#allocation2] sm:$0x1]
        %v1525 = vlaneseq
        %v1526 = vshrl.u32 %v1525, 7
        %v1527 = vsub.s32 0, %v1526
        %v1528 = vrot.slane %v1523, %v1527
        %v1530 = vmul.f32 %v1522, %v1528
        %v1531 = vld [vmem:[#allocation5] sm:$0x1]
        %v1533 = vlaneseq
        %v1534 = vshrl.u32 %v1533, 7
        %v1535 = vsub.s32 0, %v1534
        %v1536 = vrot.slane %v1531, %v1535
        %v1538 = vadd.f32 %v1530, %v1536
        %v1539 = vrot.slane %v1538, 7
        %v1540 = vsel %vm669, 0.0, %v1539
        %v1541 = vld [vmem:[%s12] sm:$0x1]
        %v1542 = vld [vmem:[%s13] sm:$0x1]
        %v1544 = vlaneseq
        %v1545 = vshrl.u32 %v1544, 7
        %v1546 = vsub.s32 0, %v1545
        %v1547 = vrot.slane %v1541, %v1546
        %v1549 = vmul.f32 %v1538, %v1547
        %v1550 = vsub.f32 1.0, %v1541
        %v1552 = vlaneseq
        %v1553 = vshrl.u32 %v1552, 7
        %v1554 = vsub.s32 0, %v1553
        %v1555 = vrot.slane %v1550, %v1554
        %v1557 = vmul.f32 %v1540, %v1555
        %v1558 = vadd.f32 %v1549, %v1557
        %v1560 = vlaneseq
        %v1561 = vshrl.u32 %v1560, 7
        %v1562 = vsub.s32 0, %v1561
        %v1563 = vrot.slane %v1542, %v1562
        %v1565 = vmul.f32 %v1538, %v1563
        %v1566 = vsub.f32 1.0, %v1542
        %v1568 = vlaneseq
        %v1569 = vshrl.u32 %v1568, 7
        %v1570 = vsub.s32 0, %v1569
        %v1571 = vrot.slane %v1566, %v1570
        %v1573 = vmul.f32 %v1540, %v1571
        %v1574 = vadd.f32 %v1565, %v1573
        %1576 = vrot.lane.b32.xlu0 %v1574, 32
        %v1577 = vpop.permute.xlu0 %1576
        %v1579 = vsel %vm635, %v1558, %v1577
        %v1580 = vld [vmem:[#allocation16] sm:$0xff]
        %v1581 = vld [vmem:[#allocation16 + $0x8] sm:$0xff]
        %v1582 = vld [vmem:[#allocation16 + $0x10] sm:$0xff]
        %v1583 = vld [vmem:[#allocation16 + $0x18] sm:$0xff]
        %v1584 = vld [vmem:[#allocation16 + $0x20] sm:$0xff]
        %v1585 = vld [vmem:[#allocation16 + $0x28] sm:$0xff]
        %v1586 = vld [vmem:[#allocation16 + $0x30] sm:$0xff]
        %v1587 = vld [vmem:[#allocation16 + $0x38] sm:$0xff]
        %v1589 = vsel %vm731, %v1579, 0
        %1591 = vmatprep.subr.mxu0 0.0
        %1592 = vmatpush1.msra.mxu0 0.0
        %1593 = vmatprep.subr.mxu0 0.0
        %1594 = vmatpush1.msra.mxu0 0.0
        %1595 = vmatprep.subr.mxu0 0.0
        %1596 = vmatpush1.msra.mxu0 0.0
        %1597 = vmatprep.subr.mxu0 0.0
        %1598 = vmatpush1.msra.mxu0 0.0
        %1599 = vmatprep.subr.mxu0 0.0
        %1600 = vmatpush1.msra.mxu0 0.0
        %1601 = vmatprep.subr.mxu0 0.0
        %1602 = vmatpush1.msra.mxu0 0.0
        %1603 = vmatprep.subr.mxu0 0.0
        %1604 = vmatpush1.msra.mxu0 0.0
        %1605 = vmatprep.subr.mxu0 0.0
        %1606 = vmatpush1.msra.mxu0 0.0
        %1607 = vmatprep.subr.mxu0 0.0
        %1608 = vmatpush1.msra.mxu0 %v1587
        %1609 = vmatprep.subr.mxu0 0.0
        %1610 = vmatpush1.msra.mxu0 %v1586
        %1611 = vmatprep.subr.mxu0 0.0
        %1612 = vmatpush1.msra.mxu0 %v1585
        %1613 = vmatprep.subr.mxu0 0.0
        %1614 = vmatpush1.msra.mxu0 %v1584
        %1615 = vmatprep.subr.mxu0 0.0
        %1616 = vmatpush1.msra.mxu0 %v1583
        %1617 = vmatprep.subr.mxu0 0.0
        %1618 = vmatpush1.msra.mxu0 %v1582
        %1619 = vmatprep.subr.mxu0 0.0
        %1620 = vmatpush1.msra.mxu0 %v1581
        %1621 = vmatprep.subr.mxu0 0.0
        %1622 = vmatpush1.msra.mxu0 %v1580
        %1623 = vmatprep.subr.mxu0 0.0
        %1624 = vmatpush2.msra.mxu0 0.0
        %1625 = vmatprep.subr.mxu0 0.0
        %1626 = vmatpush2.msra.mxu0 0.0
        %1627 = vmatprep.subr.mxu0 0.0
        %1628 = vmatpush2.msra.mxu0 0.0
        %1629 = vmatprep.subr.mxu0 0.0
        %1630 = vmatpush2.msra.mxu0 0.0
        %1631 = vmatprep.subr.mxu0 0.0
        %1632 = vmatpush2.msra.mxu0 0.0
        %1633 = vmatprep.subr.mxu0 0.0
        %1634 = vmatpush2.msra.mxu0 0.0
        %1635 = vmatprep.subr.mxu0 0.0
        %1636 = vmatpush2.msra.mxu0 0.0
        %1637 = vmatprep.subr.mxu0 0.0
        %1638 = vmatpush2.msra.mxu0 0.0
        %1639 = vmatprep.subr.mxu0 0.0
        %1640 = vmatpush2.msra.mxu0 0.0
        %1641 = vmatprep.subr.mxu0 0.0
        %1642 = vmatpush2.msra.mxu0 0.0
        %1643 = vmatprep.subr.mxu0 0.0
        %1644 = vmatpush2.msra.mxu0 0.0
        %1645 = vmatprep.subr.mxu0 0.0
        %1646 = vmatpush2.msra.mxu0 0.0
        %1647 = vmatprep.subr.mxu0 0.0
        %1648 = vmatpush2.msra.mxu0 0.0
        %1649 = vmatprep.subr.mxu0 0.0
        %1650 = vmatpush2.msra.mxu0 0.0
        %1651 = vmatprep.subr.mxu0 0.0
        %1652 = vmatpush2.msra.mxu0 0.0
        %1653 = vmatprep.subr.mxu0 0.0
        %1654 = vmatpush2.msra.mxu0 0.0
        %1655 = vmatprep.mubr.f32.mxu0 0.0
        %1656 = vmatmul.mubr.f32.gmra.mxu0 %v1589
        %v1657 = vpop.f32.mrf.mxu0
        %v1658 = vadd.f32 0.0, %v1657
        %v1659 = vpop.f32.mrf.mxu0
        %1660 = vdwg.mxu0
        %v1661 = vmax.f32 %v1658, 0.0
        %v1662 = vmul.f32 %v1661, %v1661
        %v1663 = vxor.u32 %v1658, 2147483648
        %v1664 = vmul.f32 %v1663, 1.442695
        %v1665 = vpow.pop %v1664
        %v1666 = vadd.f32 %v1665, 1.0
        %v1667 = vrcp.pop %v1666
        %v1668 = vmul.f32 1.0, %v1667
        %v1669 = vld [vmem:[%s15] sm:$0xff]
        %v1670 = vld [vmem:[%s15 + $0x8] sm:$0xff]
        %v1671 = vld [vmem:[%s15 + $0x10] sm:$0xff]
        %v1672 = vld [vmem:[%s15 + $0x18] sm:$0xff]
        %v1673 = vld [vmem:[%s15 + $0x20] sm:$0xff]
        %v1674 = vld [vmem:[%s15 + $0x28] sm:$0xff]
        %v1675 = vld [vmem:[%s15 + $0x30] sm:$0xff]
        %v1676 = vld [vmem:[%s15 + $0x38] sm:$0xff]
        %v1678 = vsel %vm731, %v1662, 0
        %1680 = vmatprep.subr.mxu0 0.0
        %1681 = vmatpush1.msra.mxu0 0.0
        %1682 = vmatprep.subr.mxu0 0.0
        %1683 = vmatpush1.msra.mxu0 0.0
        %1684 = vmatprep.subr.mxu0 0.0
        %1685 = vmatpush1.msra.mxu0 0.0
        %1686 = vmatprep.subr.mxu0 0.0
        %1687 = vmatpush1.msra.mxu0 0.0
        %1688 = vmatprep.subr.mxu0 0.0
        %1689 = vmatpush1.msra.mxu0 0.0
        %1690 = vmatprep.subr.mxu0 0.0
        %1691 = vmatpush1.msra.mxu0 0.0
        %1692 = vmatprep.subr.mxu0 0.0
        %1693 = vmatpush1.msra.mxu0 0.0
        %1694 = vmatprep.subr.mxu0 0.0
        %1695 = vmatpush1.msra.mxu0 0.0
        %1696 = vmatprep.subr.mxu0 0.0
        %1697 = vmatpush1.msra.mxu0 %v1676
        %1698 = vmatprep.subr.mxu0 0.0
        %1699 = vmatpush1.msra.mxu0 %v1675
        %1700 = vmatprep.subr.mxu0 0.0
        %1701 = vmatpush1.msra.mxu0 %v1674
        %1702 = vmatprep.subr.mxu0 0.0
        %1703 = vmatpush1.msra.mxu0 %v1673
        %1704 = vmatprep.subr.mxu0 0.0
        %1705 = vmatpush1.msra.mxu0 %v1672
        %1706 = vmatprep.subr.mxu0 0.0
        %1707 = vmatpush1.msra.mxu0 %v1671
        %1708 = vmatprep.subr.mxu0 0.0
        %1709 = vmatpush1.msra.mxu0 %v1670
        %1710 = vmatprep.subr.mxu0 0.0
        %1711 = vmatpush1.msra.mxu0 %v1669
        %1712 = vmatprep.subr.mxu0 0.0
        %1713 = vmatpush2.msra.mxu0 0.0
        %1714 = vmatprep.subr.mxu0 0.0
        %1715 = vmatpush2.msra.mxu0 0.0
        %1716 = vmatprep.subr.mxu0 0.0
        %1717 = vmatpush2.msra.mxu0 0.0
        %1718 = vmatprep.subr.mxu0 0.0
        %1719 = vmatpush2.msra.mxu0 0.0
        %1720 = vmatprep.subr.mxu0 0.0
        %1721 = vmatpush2.msra.mxu0 0.0
        %1722 = vmatprep.subr.mxu0 0.0
        %1723 = vmatpush2.msra.mxu0 0.0
        %1724 = vmatprep.subr.mxu0 0.0
        %1725 = vmatpush2.msra.mxu0 0.0
        %1726 = vmatprep.subr.mxu0 0.0
        %1727 = vmatpush2.msra.mxu0 0.0
        %1728 = vmatprep.subr.mxu0 0.0
        %1729 = vmatpush2.msra.mxu0 0.0
        %1730 = vmatprep.subr.mxu0 0.0
        %1731 = vmatpush2.msra.mxu0 0.0
        %1732 = vmatprep.subr.mxu0 0.0
        %1733 = vmatpush2.msra.mxu0 0.0
        %1734 = vmatprep.subr.mxu0 0.0
        %1735 = vmatpush2.msra.mxu0 0.0
        %1736 = vmatprep.subr.mxu0 0.0
        %1737 = vmatpush2.msra.mxu0 0.0
        %1738 = vmatprep.subr.mxu0 0.0
        %1739 = vmatpush2.msra.mxu0 0.0
        %1740 = vmatprep.subr.mxu0 0.0
        %1741 = vmatpush2.msra.mxu0 0.0
        %1742 = vmatprep.subr.mxu0 0.0
        %1743 = vmatpush2.msra.mxu0 0.0
        %1744 = vmatprep.mubr.f32.mxu0 0.0
        %1745 = vmatmul.mubr.f32.gmra.mxu0 %v1678
        %v1746 = vpop.f32.mrf.mxu0
        %v1747 = vadd.f32 0.0, %v1746
        %v1748 = vpop.f32.mrf.mxu0
        %1749 = vdwg.mxu0
        %1751 = vrot.lane.b32.xlu0 %v1747, 64
        %v1752 = vpop.permute.xlu0 %1751
        %v1754 = vmul.f32 %v1668, %v1752
        %1756 = vrot.lane.b32.xlu0 %v1754, 64
        %v1757 = vpop.permute.xlu0 %1756
        %v1759 = vadd.f32 %v1509, %v1757
        %1760 = vst.msk [vmem:[%s629] sm:$0xff] %vm635, %v1759
        %s1761 = sand.u32 %s384, 1
        %s1762 = scalar_lea.sflag [#allocation4], %s1761
        %s1763 = sand.u32 %s384, 1
        %s1764 = smul.addr %s1763, 8
        %s1765 = scalar_lea.vmem [#allocation17], %s1764
        // Predicated region
        $region121: #{tpu_custom_call.1} parent=83 // pred_check
          %p1766 = pneg %p394
        $region122: #{tpu_custom_call.1} parent=83 // pred_check_branch
          %1768 = sbr.rel (%p1766) target = $region124
        $region123: #{tpu_custom_call.1} parent=83 // pred_region
          %s1770 = ssub.s32 128, 128
          %1771 = vsyncadd %s1762, %s1770
          %s1772 = smul.addr %s35, 128
          %s1773 = scalar_lea.hbm %s16, %s1772
          %s1775 = sshll.u32 %s1765, 4
          %s1776 = int_to_ptr.vmem [resolvable:$true] %s1775
          %1778 = dma.vmem_to_hbm [thread:$0]  %s1776, 128, %s1773, %s1762
        $region124: #{tpu_custom_call.1} parent=83 // pred_fallthru
          _
      $region84: #{tpu_custom_call.1} parent=5 // pred_fallthru
        _
      %p1779 = scmp.le.s32.totalorder 2, %s30
      // Predicated region
      $region125: #{tpu_custom_call.1} parent=5 // pred_check
        %p1780 = pneg %p1779
      $region126: #{tpu_custom_call.1} parent=5 // pred_check_branch
        %1782 = sbr.rel (%p1780) target = $region128
      $region127: #{tpu_custom_call.1} parent=5 // pred_region
        %s1783 = ssub.s32 %s30, 2
        // Predicated region
        $region129: #{tpu_custom_call.1} parent=127 // pred_check
          %p1784 = pneg %p400
        $region130: #{tpu_custom_call.1} parent=127 // pred_check_branch
          %1786 = sbr.rel (%p1784) target = $region132
        $region131: #{tpu_custom_call.1} parent=127 // pred_region
          %s1787 = sand.u32 %s385, 1
          %s1788 = scalar_lea.sflag [#allocation4], %s1787
          %s1789 = sand.u32 %s385, 1
          %s1790 = smul.addr %s1789, 8
          %s1791 = scalar_lea.vmem [#allocation17], %s1790
          %1792 = dma.done %s1788, 128
        $region132: #{tpu_custom_call.1} parent=127 // pred_fallthru
          _
      $region128: #{tpu_custom_call.1} parent=5 // pred_fallthru
        _
    $region6: #{tpu_custom_call.1} parent=1 // loop_footer
      %s34 = sadd.s32 1, %s30
    $region7: #{tpu_custom_call.1} parent=1 // loop_footer_branch
      %29 = sbr.rel target = $region3
    $region8: #{tpu_custom_call.1} parent=1 // loop_exit
      _
    %1793 = vsyncpa [#allocation3], 1
    %s1794 = scalar_lea.sflag [#allocation3], 1
    %1795 = vsyncpa %s1794, 1
    %1796 = vsyncpa [#allocation6], 1
    %1797 = vsyncpa [#allocation9], 1
    %1798 = vsyncpa [#allocation12], 1
    %1799 = vsyncpa [#allocation15], 1
    %1800 = vsyncpa [#allocation4], 1
    %s1801 = scalar_lea.sflag [#allocation4], 1
    %1802 = vsyncpa %s1801, 1

</llo_original>
